<compile_context>
chip_gen: v6e
topology: v6e:2x2x1
jax: 0.10.0
libtpu: 0.0.40
codegen_flags: <defaults>
</compile_context>

<pallas_src>
import jax
import jax.numpy as jnp
from jax import lax
from jax.experimental import pallas as pl
from jax.experimental.pallas import tpu as pltpu

# ---------------- config (small, consistent with the module) ----------------
VOCAB  = 128   # vocab_size
EMBED  = 32    # embed_dim  -> word_avg => y_out_size = z_out_size = EMBED
MHSIZE = 32    # expe.config.mhsize
YSIZE  = 16    # expe.config.ysize
ZSIZE  = 16    # expe.config.zsize
B      = 4     # batch
S      = 8     # sequence length
EPS    = 1e-8  # expe.config.eps
LRATIO  = 1.0  # expe.config.lratio
PLRATIO = 1.0  # expe.config.plratio

HEAD_OUT = 64   # packed head-output slab: [mean1 0:16 | logvar1 16 | mean2 32:48 | logvar2 48:64]
OUT_W    = 128  # lane-dense scalar output slab width
# TODO(synk): dropout inside get_mlp is skipped (train-mode stochastic dropout).


# ----------------------- single fused forward kernel -----------------------
def vgvae_fused_kernel(temps_ref, ids_ref, masks_ref,
                       yemb_ref, zemb_ref,
                       hw1y_ref, hw1z_ref, hb1_ref, hw2_ref, hb2_ref,
                       dw1y_ref, dw1z_ref, db1_ref, dw2_ref, db2_ref,
                       noise_ref, out_ref):
    f32 = jnp.float32
    ids = ids_ref[...]            # (4B, S) int32: [sent1; sent2; tgt1; tgt2]
    msk = masks_ref[...]          # (4B, S) f32:   [mask1; mask2; tmask1; tmask2]

    # Weighted one-hot "bags": woh[i, v] = sum_s msk[i, s] * [ids[i, s] == v].
    # Replaces the XLA embedding gathers AND the target-token gather with
    # lane-dense (·,128) matrices that feed the MXU / row-wise dots.
    v_iota = lax.broadcasted_iota(jnp.int32, (4 * B, VOCAB), 1)
    woh = jnp.zeros((4 * B, VOCAB), f32)
    for s in range(S):            # unrolled: S tiny (4B,128) compare+FMA steps
        oh = (ids[:, s:s + 1] == v_iota).astype(f32)
        woh = woh + oh * msk[:, s:s + 1]
    msum = jnp.sum(msk, axis=1, keepdims=True)                       # (4B, 1)

    # ------------- word_avg encoders (sent1 & sent2 batched: rows 0:2B) -------------
    A = woh[0:2 * B]                                                  # (2B, VOCAB)
    m_safe = jnp.maximum(msum[0:2 * B], EPS)
    yvecs = jnp.dot(A, yemb_ref[...], preferred_element_type=f32) / m_safe   # (2B, E)
    zvecs = jnp.dot(A, zemb_ref[...], preferred_element_type=f32) / m_safe   # (2B, E)

    # ------------- four MLP heads as two packed lane-dense matmuls -------------
    # hidden layout: [mean1 | logvar1 | mean2 | logvar2], each MHSIZE wide (=128 lanes)
    h = (jnp.dot(yvecs, hw1y_ref[...], preferred_element_type=f32)
         + jnp.dot(zvecs, hw1z_ref[...], preferred_element_type=f32)
         + hb1_ref[...])
    h = jnp.maximum(h, 0.0)                                           # (2B, 128)
    heads = jnp.dot(h, hw2_ref[...], preferred_element_type=f32) + hb2_ref[...]  # (2B, 64)

    mean_raw = heads[:, 0:YSIZE]                                      # (2B, 16)
    logvar1  = heads[:, 16:17]                                        # (2B, 1)
    mean2    = heads[:, 32:32 + ZSIZE]                                # (2B, 16)
    logvar2  = heads[:, 48:48 + ZSIZE]                                # (2B, 16)

    norm = jnp.sqrt(jnp.sum(mean_raw * mean_raw, axis=-1, keepdims=True))
    mean = mean_raw / jnp.maximum(norm, EPS)                          # unit-norm vMF direction
    # vMF concentration = softplus(logvar1) + 1; only feeds rsample / kl_div (TODO below).
    var = jnp.maximum(logvar1, 0.0) + jnp.log1p(jnp.exp(-jnp.abs(logvar1))) + 1.0
    del var

    # Gaussian KL(N(mean2, exp(logvar2)) || N(0, I)), mean over each batch, summed.
    gkl_per = -0.5 * jnp.sum(1.0 + logvar2 - mean2 * mean2 - jnp.exp(logvar2),
                             axis=-1, keepdims=True)                  # (2B, 1)
    gkl = jnp.sum(gkl_per, axis=0, keepdims=True) / B                 # (1,1) = gkl1.mean()+gkl2.mean()

    # sample_gaussian: mean2 + exp(0.5 * logvar2) * N(0, 1)
    syn = mean2 + jnp.exp(0.5 * logvar2) * noise_ref[...]             # (2B, ZSIZE)
    # TODO(synk): VonMisesFisher.rsample (Wood rejection sampling + Householder) has no
    # clean Pallas equivalent; the distribution mode (unit-norm mean) is used instead.
    sem = mean                                                        # (2B, YSIZE)

    # ------------- bag_of_words decoder: all four (semantic, syntactic) pairs -------------
    hy = jnp.dot(sem, dw1y_ref[...], preferred_element_type=f32)      # (2B, MH)
    hz = jnp.dot(syn, dw1z_ref[...], preferred_element_type=f32)      # (2B, MH)
    db1 = db1_ref[...]
    dw2 = dw2_ref[...]
    db2 = db2_ref[...]

    T  = woh[2 * B:4 * B]                                             # (2B, VOCAB): tgt1, tgt2 bags
    tm = jnp.maximum(msum[2 * B:4 * B], EPS)                          # (2B, 1)

    def bow_nll(hy_blk, hz_blk, t_blk, tm_blk):
        dh = jnp.maximum(hy_blk + hz_blk + db1, 0.0)                  # (B, MH)
        logits = jnp.dot(dh, dw2, preferred_element_type=f32) + db2   # (B, VOCAB)
        mx = jnp.max(logits, axis=-1, keepdims=True)
        lse = mx + jnp.log(jnp.sum(jnp.exp(logits - mx), axis=-1, keepdims=True))
        tok = jnp.sum(t_blk * logits, axis=-1, keepdims=True)         # sum_s mask*logit[tgt]
        per = lse - tok / tm_blk                                      # masked-mean NLL per sentence
        return jnp.sum(per, axis=0, keepdims=True) / B                # batch mean, (1, 1)

    hy1, hy2 = hy[0:B], hy[B:2 * B]
    hz1, hz2 = hz[0:B], hz[B:2 * B]
    t1, t2 = T[0:B], T[B:2 * B]
    tm1, tm2 = tm[0:B], tm[B:2 * B]

    logloss1 = bow_nll(hy1, hz1, t1, tm1)   # decode(sem1, syn1, tgt1)
    logloss2 = bow_nll(hy2, hz2, t2, tm2)   # decode(sem2, syn2, tgt2)
    logloss3 = bow_nll(hy2, hz1, t1, tm1)   # decode(sem2, syn1, tgt1)
    logloss4 = bow_nll(hy1, hz2, t2, tm2)   # decode(sem1, syn2, tgt2)

    rec_logloss = logloss1 + logloss2
    para_logloss = logloss3 + logloss4

    vtemp = temps_ref[0:1, 0:1]
    gtemp = temps_ref[0:1, 1:2]
    # TODO(synk): vMF KL divergence needs modified Bessel functions; contributes 0 here.
    vkl = jnp.zeros((1, 1), f32)
    ploss = jnp.zeros((1, 1), f32)          # pratio == 0 branch
    dist = jnp.zeros((1, 1), f32)           # use_margin == False branch

    loss = (LRATIO * rec_logloss + PLRATIO * para_logloss
            + vtemp * vkl + gtemp * gkl)

    # Lane-dense (1, 128) scalar slab: [loss, vkl, gkl, rec, para, ploss, dist, 0...]
    col = lax.broadcasted_iota(jnp.int32, (1, OUT_W), 1)
    out = jnp.zeros((1, OUT_W), f32)
    for idx, val in enumerate((loss, vkl, gkl, rec_logloss, para_logloss, ploss, dist)):
        out = jnp.where(col == idx, val, out)
    out_ref[...] = out


# --------------------------------- wrapper ----------------------------------
def vgvae_forward(params, sent1, mask1, sent2, mask2,
                  tgt1, tgt_mask1, tgt2, tgt_mask2,
                  vtemp, gtemp, noise_key):
    ids = jnp.concatenate([sent1, sent2, tgt1, tgt2], axis=0).astype(jnp.int32)        # (4B, S)
    masks = jnp.concatenate([mask1, mask2, tgt_mask1, tgt_mask2], axis=0).astype(jnp.float32)
    noise = jax.random.normal(noise_key, (2 * B, ZSIZE), jnp.float32)
    temps = jnp.stack([vtemp, gtemp]).astype(jnp.float32).reshape(1, 2)

    vmem = pl.BlockSpec(memory_space=pltpu.MemorySpace.VMEM)
    slab = pl.pallas_call(
        vgvae_fused_kernel,
        out_shape=jax.ShapeDtypeStruct((1, OUT_W), jnp.float32),
        in_specs=[vmem] * 16,
        out_specs=vmem,
    )(temps, ids, masks,
      params["yembed"], params["zembed"],
      params["hw1y"], params["hw1z"], params["hb1"], params["hw2"], params["hb2"],
      params["dw1y"], params["dw1z"], params["db1"], params["dw2"], params["db2"],
      noise)

    loss, vkl, gkl = slab[0, 0], slab[0, 1], slab[0, 2]
    rec_logloss, para_logloss = slab[0, 3], slab[0, 4]
    ploss, dist = slab[0, 5], slab[0, 6]
    return loss, vkl, gkl, rec_logloss, para_logloss, ploss, dist


# ----------------------------- parameter init --------------------------------
def init_params(key):
    keys = jax.random.split(key, 16)
    it = iter(keys)

    def dense(fan_in, shape):
        return (jax.random.normal(next(it), shape, jnp.float32)
                / jnp.sqrt(jnp.float32(fan_in)))

    # both encoders are initialized from the same embed_init (as in the module)
    embed_init = 0.1 * jax.random.normal(next(it), (VOCAB, EMBED), jnp.float32)

    def head(in_dim, out_dim):
        return (dense(in_dim, (in_dim, MHSIZE)), jnp.zeros((MHSIZE,), jnp.float32),
                dense(MHSIZE, (MHSIZE, out_dim)), jnp.zeros((out_dim,), jnp.float32))

    h_m1 = head(EMBED, YSIZE)   # mean1   (fed by yvecs)
    h_l1 = head(EMBED, 1)       # logvar1 (fed by yvecs)
    h_m2 = head(EMBED, ZSIZE)   # mean2   (fed by zvecs)
    h_l2 = head(EMBED, ZSIZE)   # logvar2 (fed by zvecs)

    # Pack first layers lane-dense: hidden layout [mean1 | logvar1 | mean2 | logvar2].
    hw1y = jnp.zeros((EMBED, 4 * MHSIZE), jnp.float32)
    hw1y = hw1y.at[:, 0:MHSIZE].set(h_m1[0]).at[:, MHSIZE:2 * MHSIZE].set(h_l1[0])
    hw1z = jnp.zeros((EMBED, 4 * MHSIZE), jnp.float32)
    hw1z = hw1z.at[:, 2 * MHSIZE:3 * MHSIZE].set(h_m2[0]).at[:, 3 * MHSIZE:4 * MHSIZE].set(h_l2[0])
    hb1 = jnp.concatenate([h_m1[1], h_l1[1], h_m2[1], h_l2[1]])[None, :]        # (1, 128)

    # Pack second layers block-diagonally with 16-lane-aligned output slots.
    hw2 = jnp.zeros((4 * MHSIZE, HEAD_OUT), jnp.float32)
    hw2 = hw2.at[0:MHSIZE, 0:YSIZE].set(h_m1[2])
    hw2 = hw2.at[MHSIZE:2 * MHSIZE, 16:17].set(h_l1[2])
    hw2 = hw2.at[2 * MHSIZE:3 * MHSIZE, 32:32 + ZSIZE].set(h_m2[2])
    hw2 = hw2.at[3 * MHSIZE:4 * MHSIZE, 48:48 + ZSIZE].set(h_l2[2])
    hb2 = jnp.zeros((1, HEAD_OUT), jnp.float32)
    hb2 = (hb2.at[0, 0:YSIZE].set(h_m1[3]).at[0, 16:17].set(h_l1[3])
              .at[0, 32:32 + ZSIZE].set(h_m2[3]).at[0, 48:48 + ZSIZE].set(h_l2[3]))

    # bag_of_words decoder: concat(y, z) -> MLP -> vocab; first layer split y/z.
    dw1y = dense(YSIZE + ZSIZE, (YSIZE, MHSIZE))
    dw1z = dense(YSIZE + ZSIZE, (ZSIZE, MHSIZE))
    db1 = jnp.zeros((1, MHSIZE), jnp.float32)
    dw2 = dense(MHSIZE, (MHSIZE, VOCAB))
    db2 = jnp.zeros((1, VOCAB), jnp.float32)

    return {
        "yembed": embed_init, "zembed": embed_init,
        "hw1y": hw1y, "hw1z": hw1z, "hb1": hb1, "hw2": hw2, "hb2": hb2,
        "dw1y": dw1y, "dw1z": dw1z, "db1": db1, "dw2": dw2, "db2": db2,
    }


# ----------------------------------- main -------------------------------------
if __name__ == "__main__":
    key = jax.random.PRNGKey(0)
    kp, k1, k2, k3, k4, kn = jax.random.split(key, 6)

    params = init_params(kp)

    sent1 = jax.random.randint(k1, (B, S), 0, VOCAB, dtype=jnp.int32)
    sent2 = jax.random.randint(k2, (B, S), 0, VOCAB, dtype=jnp.int32)
    tgt1  = jax.random.randint(k3, (B, S), 0, VOCAB, dtype=jnp.int32)
    tgt2  = jax.random.randint(k4, (B, S), 0, VOCAB, dtype=jnp.int32)

    # masks: full for the first rows, partially padded for the rest
    base_mask = jnp.ones((B, S), jnp.float32)
    mask1 = base_mask.at[2:, S - 2:].set(0.0)
    mask2 = base_mask.at[1:, S - 3:].set(0.0)
    tgt_mask1 = mask1
    tgt_mask2 = mask2

    vtemp = jnp.float32(1.0)
    gtemp = jnp.float32(1.0)

    fwd = jax.jit(vgvae_forward)
    outs = fwd(params, sent1, mask1, sent2, mask2,
               tgt1, tgt_mask1, tgt2, tgt_mask2, vtemp, gtemp, kn)
    outs = jax.block_until_ready(outs)

    loss, vkl, gkl, rec, para, ploss, dist = outs
    assert jnp.isfinite(loss), "non-finite loss"
    print("KERNEL_OK")
</pallas_src>

<mosaic_0001>
module attributes {stable_mosaic.version = 11 : i64} {
  func.func @vgvae_fused_kernel(%arg0: memref<1x2xf32, #tpu.memory_space<vmem>>, %arg1: memref<16x8xi32, #tpu.memory_space<vmem>>, %arg2: memref<16x8xf32, #tpu.memory_space<vmem>>, %arg3: memref<128x32xf32, #tpu.memory_space<vmem>>, %arg4: memref<128x32xf32, #tpu.memory_space<vmem>>, %arg5: memref<32x128xf32, #tpu.memory_space<vmem>>, %arg6: memref<32x128xf32, #tpu.memory_space<vmem>>, %arg7: memref<1x128xf32, #tpu.memory_space<vmem>>, %arg8: memref<128x64xf32, #tpu.memory_space<vmem>>, %arg9: memref<1x64xf32, #tpu.memory_space<vmem>>, %arg10: memref<16x32xf32, #tpu.memory_space<vmem>>, %arg11: memref<16x32xf32, #tpu.memory_space<vmem>>, %arg12: memref<1x32xf32, #tpu.memory_space<vmem>>, %arg13: memref<32x128xf32, #tpu.memory_space<vmem>>, %arg14: memref<1x128xf32, #tpu.memory_space<vmem>>, %arg15: memref<8x16xf32, #tpu.memory_space<vmem>>, %arg16: memref<1x128xf32, #tpu.memory_space<vmem>>) attributes {dimension_semantics = [], scalar_prefetch = 0 : i64, scratch_operands = 0 : i64, tpu.core_type = #tpu.core_type<tc>} {
    %c0 = arith.constant 0 : index
    %c0_0 = arith.constant 0 : index
    %0 = vector.load %arg1[%c0, %c0_0] : memref<16x8xi32, #tpu.memory_space<vmem>>, vector<16x8xi32>
    %c0_1 = arith.constant 0 : index
    %c0_2 = arith.constant 0 : index
    %1 = vector.load %arg2[%c0_1, %c0_2] : memref<16x8xf32, #tpu.memory_space<vmem>>, vector<16x8xf32>
    %2 = tpu.iota {dimensions = array<i32: 1>} : vector<16x128xi32>
    %cst = arith.constant 0.000000e+00 : f32
    %3 = vector.broadcast %cst : f32 to vector<16x128xf32>
    %4 = vector.extract_strided_slice %0 {offsets = [0, 0], sizes = [16, 1], strides = [1, 1]} : vector<16x8xi32> to vector<16x1xi32>
    %5 = vector.broadcast %4 : vector<16x1xi32> to vector<16x128xi32>
    %6 = arith.cmpi eq, %5, %2 : vector<16x128xi32>
    %7 = arith.extui %6 : vector<16x128xi1> to vector<16x128xi32>
    %8 = arith.sitofp %7 : vector<16x128xi32> to vector<16x128xf32>
    %9 = vector.extract_strided_slice %1 {offsets = [0, 0], sizes = [16, 1], strides = [1, 1]} : vector<16x8xf32> to vector<16x1xf32>
    %10 = vector.broadcast %9 : vector<16x1xf32> to vector<16x128xf32>
    %11 = arith.mulf %8, %10 : vector<16x128xf32>
    %12 = arith.addf %3, %11 : vector<16x128xf32>
    %13 = vector.extract_strided_slice %0 {offsets = [0, 1], sizes = [16, 1], strides = [1, 1]} : vector<16x8xi32> to vector<16x1xi32>
    %14 = vector.broadcast %13 : vector<16x1xi32> to vector<16x128xi32>
    %15 = arith.cmpi eq, %14, %2 : vector<16x128xi32>
    %16 = arith.extui %15 : vector<16x128xi1> to vector<16x128xi32>
    %17 = arith.sitofp %16 : vector<16x128xi32> to vector<16x128xf32>
    %18 = vector.extract_strided_slice %1 {offsets = [0, 1], sizes = [16, 1], strides = [1, 1]} : vector<16x8xf32> to vector<16x1xf32>
    %19 = vector.broadcast %18 : vector<16x1xf32> to vector<16x128xf32>
    %20 = arith.mulf %17, %19 : vector<16x128xf32>
    %21 = arith.addf %12, %20 : vector<16x128xf32>
    %22 = vector.extract_strided_slice %0 {offsets = [0, 2], sizes = [16, 1], strides = [1, 1]} : vector<16x8xi32> to vector<16x1xi32>
    %23 = vector.broadcast %22 : vector<16x1xi32> to vector<16x128xi32>
    %24 = arith.cmpi eq, %23, %2 : vector<16x128xi32>
    %25 = arith.extui %24 : vector<16x128xi1> to vector<16x128xi32>
    %26 = arith.sitofp %25 : vector<16x128xi32> to vector<16x128xf32>
    %27 = vector.extract_strided_slice %1 {offsets = [0, 2], sizes = [16, 1], strides = [1, 1]} : vector<16x8xf32> to vector<16x1xf32>
    %28 = vector.broadcast %27 : vector<16x1xf32> to vector<16x128xf32>
    %29 = arith.mulf %26, %28 : vector<16x128xf32>
    %30 = arith.addf %21, %29 : vector<16x128xf32>
    %31 = vector.extract_strided_slice %0 {offsets = [0, 3], sizes = [16, 1], strides = [1, 1]} : vector<16x8xi32> to vector<16x1xi32>
    %32 = vector.broadcast %31 : vector<16x1xi32> to vector<16x128xi32>
    %33 = arith.cmpi eq, %32, %2 : vector<16x128xi32>
    %34 = arith.extui %33 : vector<16x128xi1> to vector<16x128xi32>
    %35 = arith.sitofp %34 : vector<16x128xi32> to vector<16x128xf32>
    %36 = vector.extract_strided_slice %1 {offsets = [0, 3], sizes = [16, 1], strides = [1, 1]} : vector<16x8xf32> to vector<16x1xf32>
    %37 = vector.broadcast %36 : vector<16x1xf32> to vector<16x128xf32>
    %38 = arith.mulf %35, %37 : vector<16x128xf32>
    %39 = arith.addf %30, %38 : vector<16x128xf32>
    %40 = vector.extract_strided_slice %0 {offsets = [0, 4], sizes = [16, 1], strides = [1, 1]} : vector<16x8xi32> to vector<16x1xi32>
    %41 = vector.broadcast %40 : vector<16x1xi32> to vector<16x128xi32>
    %42 = arith.cmpi eq, %41, %2 : vector<16x128xi32>
    %43 = arith.extui %42 : vector<16x128xi1> to vector<16x128xi32>
    %44 = arith.sitofp %43 : vector<16x128xi32> to vector<16x128xf32>
    %45 = vector.extract_strided_slice %1 {offsets = [0, 4], sizes = [16, 1], strides = [1, 1]} : vector<16x8xf32> to vector<16x1xf32>
    %46 = vector.broadcast %45 : vector<16x1xf32> to vector<16x128xf32>
    %47 = arith.mulf %44, %46 : vector<16x128xf32>
    %48 = arith.addf %39, %47 : vector<16x128xf32>
    %49 = vector.extract_strided_slice %0 {offsets = [0, 5], sizes = [16, 1], strides = [1, 1]} : vector<16x8xi32> to vector<16x1xi32>
    %50 = vector.broadcast %49 : vector<16x1xi32> to vector<16x128xi32>
    %51 = arith.cmpi eq, %50, %2 : vector<16x128xi32>
    %52 = arith.extui %51 : vector<16x128xi1> to vector<16x128xi32>
    %53 = arith.sitofp %52 : vector<16x128xi32> to vector<16x128xf32>
    %54 = vector.extract_strided_slice %1 {offsets = [0, 5], sizes = [16, 1], strides = [1, 1]} : vector<16x8xf32> to vector<16x1xf32>
    %55 = vector.broadcast %54 : vector<16x1xf32> to vector<16x128xf32>
    %56 = arith.mulf %53, %55 : vector<16x128xf32>
    %57 = arith.addf %48, %56 : vector<16x128xf32>
    %58 = vector.extract_strided_slice %0 {offsets = [0, 6], sizes = [16, 1], strides = [1, 1]} : vector<16x8xi32> to vector<16x1xi32>
    %59 = vector.broadcast %58 : vector<16x1xi32> to vector<16x128xi32>
    %60 = arith.cmpi eq, %59, %2 : vector<16x128xi32>
    %61 = arith.extui %60 : vector<16x128xi1> to vector<16x128xi32>
    %62 = arith.sitofp %61 : vector<16x128xi32> to vector<16x128xf32>
    %63 = vector.extract_strided_slice %1 {offsets = [0, 6], sizes = [16, 1], strides = [1, 1]} : vector<16x8xf32> to vector<16x1xf32>
    %64 = vector.broadcast %63 : vector<16x1xf32> to vector<16x128xf32>
    %65 = arith.mulf %62, %64 : vector<16x128xf32>
    %66 = arith.addf %57, %65 : vector<16x128xf32>
    %67 = vector.extract_strided_slice %0 {offsets = [0, 7], sizes = [16, 1], strides = [1, 1]} : vector<16x8xi32> to vector<16x1xi32>
    %68 = vector.broadcast %67 : vector<16x1xi32> to vector<16x128xi32>
    %69 = arith.cmpi eq, %68, %2 : vector<16x128xi32>
    %70 = arith.extui %69 : vector<16x128xi1> to vector<16x128xi32>
    %71 = arith.sitofp %70 : vector<16x128xi32> to vector<16x128xf32>
    %72 = vector.extract_strided_slice %1 {offsets = [0, 7], sizes = [16, 1], strides = [1, 1]} : vector<16x8xf32> to vector<16x1xf32>
    %73 = vector.broadcast %72 : vector<16x1xf32> to vector<16x128xf32>
    %74 = arith.mulf %71, %73 : vector<16x128xf32>
    %75 = arith.addf %66, %74 : vector<16x128xf32>
    %cst_3 = arith.constant dense<0.000000e+00> : vector<16xf32>
    %76 = vector.multi_reduction <add>, %1, %cst_3 [1] : vector<16x8xf32> to vector<16xf32>
    %77 = vector.shape_cast %76 : vector<16xf32> to vector<16x1xf32>
    %78 = vector.extract_strided_slice %75 {offsets = [0, 0], sizes = [8, 128], strides = [1, 1]} : vector<16x128xf32> to vector<8x128xf32>
    %79 = vector.extract_strided_slice %77 {offsets = [0, 0], sizes = [8, 1], strides = [1, 1]} : vector<16x1xf32> to vector<8x1xf32>
    %cst_4 = arith.constant 9.99999993E-9 : f32
    %80 = vector.broadcast %cst_4 : f32 to vector<8x1xf32>
    %81 = arith.maximumf %79, %80 : vector<8x1xf32>
    %c0_5 = arith.constant 0 : index
    %c0_6 = arith.constant 0 : index
    %82 = vector.load %arg3[%c0_5, %c0_6] : memref<128x32xf32, #tpu.memory_space<vmem>>, vector<128x32xf32>
    %cst_7 = arith.constant dense<0.000000e+00> : vector<8x32xf32>
    %83 = tpu.matmul %78, %82, %cst_7 {dimension_numbers = #tpu.dot_dimension_numbers<[1], [0], [0], [1], [0, 0, 1, 1], [], []>} : vector<8x128xf32>, vector<128x32xf32>, vector<8x32xf32> -> vector<8x32xf32>
    %84 = vector.broadcast %81 : vector<8x1xf32> to vector<8x32xf32>
    %85 = arith.divf %83, %84 : vector<8x32xf32>
    %c0_8 = arith.constant 0 : index
    %c0_9 = arith.constant 0 : index
    %86 = vector.load %arg4[%c0_8, %c0_9] : memref<128x32xf32, #tpu.memory_space<vmem>>, vector<128x32xf32>
    %cst_10 = arith.constant dense<0.000000e+00> : vector<8x32xf32>
    %87 = tpu.matmul %78, %86, %cst_10 {dimension_numbers = #tpu.dot_dimension_numbers<[1], [0], [0], [1], [0, 0, 1, 1], [], []>} : vector<8x128xf32>, vector<128x32xf32>, vector<8x32xf32> -> vector<8x32xf32>
    %88 = vector.broadcast %81 : vector<8x1xf32> to vector<8x32xf32>
    %89 = arith.divf %87, %88 : vector<8x32xf32>
    %c0_11 = arith.constant 0 : index
    %c0_12 = arith.constant 0 : index
    %90 = vector.load %arg5[%c0_11, %c0_12] : memref<32x128xf32, #tpu.memory_space<vmem>>, vector<32x128xf32>
    %cst_13 = arith.constant dense<0.000000e+00> : vector<8x128xf32>
    %91 = tpu.matmul %85, %90, %cst_13 {dimension_numbers = #tpu.dot_dimension_numbers<[1], [0], [0], [1], [0, 0, 1, 1], [], []>} : vector<8x32xf32>, vector<32x128xf32>, vector<8x128xf32> -> vector<8x128xf32>
    %c0_14 = arith.constant 0 : index
    %c0_15 = arith.constant 0 : index
    %92 = vector.load %arg6[%c0_14, %c0_15] : memref<32x128xf32, #tpu.memory_space<vmem>>, vector<32x128xf32>
    %cst_16 = arith.constant dense<0.000000e+00> : vector<8x128xf32>
    %93 = tpu.matmul %89, %92, %cst_16 {dimension_numbers = #tpu.dot_dimension_numbers<[1], [0], [0], [1], [0, 0, 1, 1], [], []>} : vector<8x32xf32>, vector<32x128xf32>, vector<8x128xf32> -> vector<8x128xf32>
    %94 = arith.addf %91, %93 : vector<8x128xf32>
    %c0_17 = arith.constant 0 : index
    %c0_18 = arith.constant 0 : index
    %95 = vector.load %arg7[%c0_17, %c0_18] : memref<1x128xf32, #tpu.memory_space<vmem>>, vector<1x128xf32>
    %96 = vector.broadcast %95 : vector<1x128xf32> to vector<8x128xf32>
    %97 = arith.addf %94, %96 : vector<8x128xf32>
    %cst_19 = arith.constant 0.000000e+00 : f32
    %98 = vector.broadcast %cst_19 : f32 to vector<8x128xf32>
    %99 = arith.maximumf %97, %98 : vector<8x128xf32>
    %c0_20 = arith.constant 0 : index
    %c0_21 = arith.constant 0 : index
    %100 = vector.load %arg8[%c0_20, %c0_21] : memref<128x64xf32, #tpu.memory_space<vmem>>, vector<128x64xf32>
    %cst_22 = arith.constant dense<0.000000e+00> : vector<8x64xf32>
    %101 = tpu.matmul %99, %100, %cst_22 {dimension_numbers = #tpu.dot_dimension_numbers<[1], [0], [0], [1], [0, 0, 1, 1], [], []>} : vector<8x128xf32>, vector<128x64xf32>, vector<8x64xf32> -> vector<8x64xf32>
    %c0_23 = arith.constant 0 : index
    %c0_24 = arith.constant 0 : index
    %102 = vector.load %arg9[%c0_23, %c0_24] : memref<1x64xf32, #tpu.memory_space<vmem>>, vector<1x64xf32>
    %103 = vector.broadcast %102 : vector<1x64xf32> to vector<8x64xf32>
    %104 = arith.addf %101, %103 : vector<8x64xf32>
    %105 = vector.extract_strided_slice %104 {offsets = [0, 0], sizes = [8, 16], strides = [1, 1]} : vector<8x64xf32> to vector<8x16xf32>
    %106 = vector.extract_strided_slice %104 {offsets = [0, 32], sizes = [8, 16], strides = [1, 1]} : vector<8x64xf32> to vector<8x16xf32>
    %107 = vector.extract_strided_slice %104 {offsets = [0, 48], sizes = [8, 16], strides = [1, 1]} : vector<8x64xf32> to vector<8x16xf32>
    %108 = arith.mulf %105, %105 : vector<8x16xf32>
    %cst_25 = arith.constant dense<0.000000e+00> : vector<8xf32>
    %109 = vector.multi_reduction <add>, %108, %cst_25 [1] : vector<8x16xf32> to vector<8xf32>
    %110 = vector.shape_cast %109 : vector<8xf32> to vector<8x1xf32>
    %111 = math.sqrt %110 : vector<8x1xf32>
    %cst_26 = arith.constant 9.99999993E-9 : f32
    %112 = vector.broadcast %cst_26 : f32 to vector<8x1xf32>
    %113 = arith.maximumf %111, %112 : vector<8x1xf32>
    %114 = vector.broadcast %113 : vector<8x1xf32> to vector<8x16xf32>
    %115 = arith.divf %105, %114 : vector<8x16xf32>
    %cst_27 = arith.constant 1.000000e+00 : f32
    %116 = vector.broadcast %cst_27 : f32 to vector<8x16xf32>
    %117 = arith.addf %116, %107 : vector<8x16xf32>
    %118 = arith.mulf %106, %106 : vector<8x16xf32>
    %119 = arith.subf %117, %118 : vector<8x16xf32>
    %120 = math.exp %107 : vector<8x16xf32>
    %121 = arith.subf %119, %120 : vector<8x16xf32>
    %cst_28 = arith.constant dense<0.000000e+00> : vector<8xf32>
    %122 = vector.multi_reduction <add>, %121, %cst_28 [1] : vector<8x16xf32> to vector<8xf32>
    %123 = vector.shape_cast %122 : vector<8xf32> to vector<8x1xf32>
    %cst_29 = arith.constant -5.000000e-01 : f32
    %124 = vector.broadcast %cst_29 : f32 to vector<8x1xf32>
    %125 = arith.mulf %124, %123 : vector<8x1xf32>
    %cst_30 = arith.constant dense<0.000000e+00> : vector<1xf32>
    %126 = vector.multi_reduction <add>, %125, %cst_30 [0] : vector<8x1xf32> to vector<1xf32>
    %127 = vector.shape_cast %126 : vector<1xf32> to vector<1x1xf32>
    %cst_31 = arith.constant 4.000000e+00 : f32
    %128 = vector.broadcast %cst_31 : f32 to vector<1x1xf32>
    %129 = arith.divf %127, %128 : vector<1x1xf32>
    %cst_32 = arith.constant 5.000000e-01 : f32
    %130 = vector.broadcast %cst_32 : f32 to vector<8x16xf32>
    %131 = arith.mulf %130, %107 : vector<8x16xf32>
    %132 = math.exp %131 : vector<8x16xf32>
    %c0_33 = arith.constant 0 : index
    %c0_34 = arith.constant 0 : index
    %133 = vector.load %arg15[%c0_33, %c0_34] : memref<8x16xf32, #tpu.memory_space<vmem>>, vector<8x16xf32>
    %134 = arith.mulf %132, %133 : vector<8x16xf32>
    %135 = arith.addf %106, %134 : vector<8x16xf32>
    %c0_35 = arith.constant 0 : index
    %c0_36 = arith.constant 0 : index
    %136 = vector.load %arg10[%c0_35, %c0_36] : memref<16x32xf32, #tpu.memory_space<vmem>>, vector<16x32xf32>
    %cst_37 = arith.constant dense<0.000000e+00> : vector<8x32xf32>
    %137 = tpu.matmul %115, %136, %cst_37 {dimension_numbers = #tpu.dot_dimension_numbers<[1], [0], [0], [1], [0, 0, 1, 1], [], []>} : vector<8x16xf32>, vector<16x32xf32>, vector<8x32xf32> -> vector<8x32xf32>
    %c0_38 = arith.constant 0 : index
    %c0_39 = arith.constant 0 : index
    %138 = vector.load %arg11[%c0_38, %c0_39] : memref<16x32xf32, #tpu.memory_space<vmem>>, vector<16x32xf32>
    %cst_40 = arith.constant dense<0.000000e+00> : vector<8x32xf32>
    %139 = tpu.matmul %135, %138, %cst_40 {dimension_numbers = #tpu.dot_dimension_numbers<[1], [0], [0], [1], [0, 0, 1, 1], [], []>} : vector<8x16xf32>, vector<16x32xf32>, vector<8x32xf32> -> vector<8x32xf32>
    %c0_41 = arith.constant 0 : index
    %c0_42 = arith.constant 0 : index
    %140 = vector.load %arg12[%c0_41, %c0_42] : memref<1x32xf32, #tpu.memory_space<vmem>>, vector<1x32xf32>
    %c0_43 = arith.constant 0 : index
    %c0_44 = arith.constant 0 : index
    %141 = vector.load %arg13[%c0_43, %c0_44] : memref<32x128xf32, #tpu.memory_space<vmem>>, vector<32x128xf32>
    %c0_45 = arith.constant 0 : index
    %c0_46 = arith.constant 0 : index
    %142 = vector.load %arg14[%c0_45, %c0_46] : memref<1x128xf32, #tpu.memory_space<vmem>>, vector<1x128xf32>
    %143 = vector.extract_strided_slice %75 {offsets = [8, 0], sizes = [8, 128], strides = [1, 1]} : vector<16x128xf32> to vector<8x128xf32>
    %144 = vector.extract_strided_slice %77 {offsets = [8, 0], sizes = [8, 1], strides = [1, 1]} : vector<16x1xf32> to vector<8x1xf32>
    %cst_47 = arith.constant 9.99999993E-9 : f32
    %145 = vector.broadcast %cst_47 : f32 to vector<8x1xf32>
    %146 = arith.maximumf %144, %145 : vector<8x1xf32>
    %147 = vector.extract_strided_slice %137 {offsets = [0, 0], sizes = [4, 32], strides = [1, 1]} : vector<8x32xf32> to vector<4x32xf32>
    %148 = vector.extract_strided_slice %137 {offsets = [4, 0], sizes = [4, 32], strides = [1, 1]} : vector<8x32xf32> to vector<4x32xf32>
    %149 = vector.extract_strided_slice %139 {offsets = [0, 0], sizes = [4, 32], strides = [1, 1]} : vector<8x32xf32> to vector<4x32xf32>
    %150 = vector.extract_strided_slice %139 {offsets = [4, 0], sizes = [4, 32], strides = [1, 1]} : vector<8x32xf32> to vector<4x32xf32>
    %151 = vector.extract_strided_slice %143 {offsets = [0, 0], sizes = [4, 128], strides = [1, 1]} : vector<8x128xf32> to vector<4x128xf32>
    %152 = vector.extract_strided_slice %143 {offsets = [4, 0], sizes = [4, 128], strides = [1, 1]} : vector<8x128xf32> to vector<4x128xf32>
    %153 = vector.extract_strided_slice %146 {offsets = [0, 0], sizes = [4, 1], strides = [1, 1]} : vector<8x1xf32> to vector<4x1xf32>
    %154 = vector.extract_strided_slice %146 {offsets = [4, 0], sizes = [4, 1], strides = [1, 1]} : vector<8x1xf32> to vector<4x1xf32>
    %155 = arith.addf %147, %149 : vector<4x32xf32>
    %156 = vector.broadcast %140 : vector<1x32xf32> to vector<4x32xf32>
    %157 = arith.addf %155, %156 : vector<4x32xf32>
    %cst_48 = arith.constant 0.000000e+00 : f32
    %158 = vector.broadcast %cst_48 : f32 to vector<4x32xf32>
    %159 = arith.maximumf %157, %158 : vector<4x32xf32>
    %cst_49 = arith.constant dense<0.000000e+00> : vector<4x128xf32>
    %160 = tpu.matmul %159, %141, %cst_49 {dimension_numbers = #tpu.dot_dimension_numbers<[1], [0], [0], [1], [0, 0, 1, 1], [], []>} : vector<4x32xf32>, vector<32x128xf32>, vector<4x128xf32> -> vector<4x128xf32>
    %161 = vector.broadcast %142 : vector<1x128xf32> to vector<4x128xf32>
    %162 = arith.addf %160, %161 : vector<4x128xf32>
    %cst_50 = arith.constant dense<0xFF800000> : vector<4xf32>
    %163 = vector.multi_reduction <maximumf>, %162, %cst_50 [1] : vector<4x128xf32> to vector<4xf32>
    %164 = vector.shape_cast %163 : vector<4xf32> to vector<4x1xf32>
    %165 = vector.broadcast %164 : vector<4x1xf32> to vector<4x128xf32>
    %166 = arith.subf %162, %165 : vector<4x128xf32>
    %167 = math.exp %166 : vector<4x128xf32>
    %cst_51 = arith.constant dense<0.000000e+00> : vector<4xf32>
    %168 = vector.multi_reduction <add>, %167, %cst_51 [1] : vector<4x128xf32> to vector<4xf32>
    %169 = vector.shape_cast %168 : vector<4xf32> to vector<4x1xf32>
    %170 = math.log %169 : vector<4x1xf32>
    %171 = arith.addf %164, %170 : vector<4x1xf32>
    %172 = arith.mulf %151, %162 : vector<4x128xf32>
    %cst_52 = arith.constant dense<0.000000e+00> : vector<4xf32>
    %173 = vector.multi_reduction <add>, %172, %cst_52 [1] : vector<4x128xf32> to vector<4xf32>
    %174 = vector.shape_cast %173 : vector<4xf32> to vector<4x1xf32>
    %175 = arith.divf %174, %153 : vector<4x1xf32>
    %176 = arith.subf %171, %175 : vector<4x1xf32>
    %cst_53 = arith.constant dense<0.000000e+00> : vector<1xf32>
    %177 = vector.multi_reduction <add>, %176, %cst_53 [0] : vector<4x1xf32> to vector<1xf32>
    %178 = vector.shape_cast %177 : vector<1xf32> to vector<1x1xf32>
    %cst_54 = arith.constant 4.000000e+00 : f32
    %179 = vector.broadcast %cst_54 : f32 to vector<1x1xf32>
    %180 = arith.divf %178, %179 : vector<1x1xf32>
    %181 = arith.addf %148, %150 : vector<4x32xf32>
    %182 = vector.broadcast %140 : vector<1x32xf32> to vector<4x32xf32>
    %183 = arith.addf %181, %182 : vector<4x32xf32>
    %cst_55 = arith.constant 0.000000e+00 : f32
    %184 = vector.broadcast %cst_55 : f32 to vector<4x32xf32>
    %185 = arith.maximumf %183, %184 : vector<4x32xf32>
    %cst_56 = arith.constant dense<0.000000e+00> : vector<4x128xf32>
    %186 = tpu.matmul %185, %141, %cst_56 {dimension_numbers = #tpu.dot_dimension_numbers<[1], [0], [0], [1], [0, 0, 1, 1], [], []>} : vector<4x32xf32>, vector<32x128xf32>, vector<4x128xf32> -> vector<4x128xf32>
    %187 = vector.broadcast %142 : vector<1x128xf32> to vector<4x128xf32>
    %188 = arith.addf %186, %187 : vector<4x128xf32>
    %cst_57 = arith.constant dense<0xFF800000> : vector<4xf32>
    %189 = vector.multi_reduction <maximumf>, %188, %cst_57 [1] : vector<4x128xf32> to vector<4xf32>
    %190 = vector.shape_cast %189 : vector<4xf32> to vector<4x1xf32>
    %191 = vector.broadcast %190 : vector<4x1xf32> to vector<4x128xf32>
    %192 = arith.subf %188, %191 : vector<4x128xf32>
    %193 = math.exp %192 : vector<4x128xf32>
    %cst_58 = arith.constant dense<0.000000e+00> : vector<4xf32>
    %194 = vector.multi_reduction <add>, %193, %cst_58 [1] : vector<4x128xf32> to vector<4xf32>
    %195 = vector.shape_cast %194 : vector<4xf32> to vector<4x1xf32>
    %196 = math.log %195 : vector<4x1xf32>
    %197 = arith.addf %190, %196 : vector<4x1xf32>
    %198 = arith.mulf %152, %188 : vector<4x128xf32>
    %cst_59 = arith.constant dense<0.000000e+00> : vector<4xf32>
    %199 = vector.multi_reduction <add>, %198, %cst_59 [1] : vector<4x128xf32> to vector<4xf32>
    %200 = vector.shape_cast %199 : vector<4xf32> to vector<4x1xf32>
    %201 = arith.divf %200, %154 : vector<4x1xf32>
    %202 = arith.subf %197, %201 : vector<4x1xf32>
    %cst_60 = arith.constant dense<0.000000e+00> : vector<1xf32>
    %203 = vector.multi_reduction <add>, %202, %cst_60 [0] : vector<4x1xf32> to vector<1xf32>
    %204 = vector.shape_cast %203 : vector<1xf32> to vector<1x1xf32>
    %cst_61 = arith.constant 4.000000e+00 : f32
    %205 = vector.broadcast %cst_61 : f32 to vector<1x1xf32>
    %206 = arith.divf %204, %205 : vector<1x1xf32>
    %207 = arith.addf %148, %149 : vector<4x32xf32>
    %208 = vector.broadcast %140 : vector<1x32xf32> to vector<4x32xf32>
    %209 = arith.addf %207, %208 : vector<4x32xf32>
    %cst_62 = arith.constant 0.000000e+00 : f32
    %210 = vector.broadcast %cst_62 : f32 to vector<4x32xf32>
    %211 = arith.maximumf %209, %210 : vector<4x32xf32>
    %cst_63 = arith.constant dense<0.000000e+00> : vector<4x128xf32>
    %212 = tpu.matmul %211, %141, %cst_63 {dimension_numbers = #tpu.dot_dimension_numbers<[1], [0], [0], [1], [0, 0, 1, 1], [], []>} : vector<4x32xf32>, vector<32x128xf32>, vector<4x128xf32> -> vector<4x128xf32>
    %213 = vector.broadcast %142 : vector<1x128xf32> to vector<4x128xf32>
    %214 = arith.addf %212, %213 : vector<4x128xf32>
    %cst_64 = arith.constant dense<0xFF800000> : vector<4xf32>
    %215 = vector.multi_reduction <maximumf>, %214, %cst_64 [1] : vector<4x128xf32> to vector<4xf32>
    %216 = vector.shape_cast %215 : vector<4xf32> to vector<4x1xf32>
    %217 = vector.broadcast %216 : vector<4x1xf32> to vector<4x128xf32>
    %218 = arith.subf %214, %217 : vector<4x128xf32>
    %219 = math.exp %218 : vector<4x128xf32>
    %cst_65 = arith.constant dense<0.000000e+00> : vector<4xf32>
    %220 = vector.multi_reduction <add>, %219, %cst_65 [1] : vector<4x128xf32> to vector<4xf32>
    %221 = vector.shape_cast %220 : vector<4xf32> to vector<4x1xf32>
    %222 = math.log %221 : vector<4x1xf32>
    %223 = arith.addf %216, %222 : vector<4x1xf32>
    %224 = arith.mulf %151, %214 : vector<4x128xf32>
    %cst_66 = arith.constant dense<0.000000e+00> : vector<4xf32>
    %225 = vector.multi_reduction <add>, %224, %cst_66 [1] : vector<4x128xf32> to vector<4xf32>
    %226 = vector.shape_cast %225 : vector<4xf32> to vector<4x1xf32>
    %227 = arith.divf %226, %153 : vector<4x1xf32>
    %228 = arith.subf %223, %227 : vector<4x1xf32>
    %cst_67 = arith.constant dense<0.000000e+00> : vector<1xf32>
    %229 = vector.multi_reduction <add>, %228, %cst_67 [0] : vector<4x1xf32> to vector<1xf32>
    %230 = vector.shape_cast %229 : vector<1xf32> to vector<1x1xf32>
    %cst_68 = arith.constant 4.000000e+00 : f32
    %231 = vector.broadcast %cst_68 : f32 to vector<1x1xf32>
    %232 = arith.divf %230, %231 : vector<1x1xf32>
    %233 = arith.addf %147, %150 : vector<4x32xf32>
    %234 = vector.broadcast %140 : vector<1x32xf32> to vector<4x32xf32>
    %235 = arith.addf %233, %234 : vector<4x32xf32>
    %cst_69 = arith.constant 0.000000e+00 : f32
    %236 = vector.broadcast %cst_69 : f32 to vector<4x32xf32>
    %237 = arith.maximumf %235, %236 : vector<4x32xf32>
    %cst_70 = arith.constant dense<0.000000e+00> : vector<4x128xf32>
    %238 = tpu.matmul %237, %141, %cst_70 {dimension_numbers = #tpu.dot_dimension_numbers<[1], [0], [0], [1], [0, 0, 1, 1], [], []>} : vector<4x32xf32>, vector<32x128xf32>, vector<4x128xf32> -> vector<4x128xf32>
    %239 = vector.broadcast %142 : vector<1x128xf32> to vector<4x128xf32>
    %240 = arith.addf %238, %239 : vector<4x128xf32>
    %cst_71 = arith.constant dense<0xFF800000> : vector<4xf32>
    %241 = vector.multi_reduction <maximumf>, %240, %cst_71 [1] : vector<4x128xf32> to vector<4xf32>
    %242 = vector.shape_cast %241 : vector<4xf32> to vector<4x1xf32>
    %243 = vector.broadcast %242 : vector<4x1xf32> to vector<4x128xf32>
    %244 = arith.subf %240, %243 : vector<4x128xf32>
    %245 = math.exp %244 : vector<4x128xf32>
    %cst_72 = arith.constant dense<0.000000e+00> : vector<4xf32>
    %246 = vector.multi_reduction <add>, %245, %cst_72 [1] : vector<4x128xf32> to vector<4xf32>
    %247 = vector.shape_cast %246 : vector<4xf32> to vector<4x1xf32>
    %248 = math.log %247 : vector<4x1xf32>
    %249 = arith.addf %242, %248 : vector<4x1xf32>
    %250 = arith.mulf %152, %240 : vector<4x128xf32>
    %cst_73 = arith.constant dense<0.000000e+00> : vector<4xf32>
    %251 = vector.multi_reduction <add>, %250, %cst_73 [1] : vector<4x128xf32> to vector<4xf32>
    %252 = vector.shape_cast %251 : vector<4xf32> to vector<4x1xf32>
    %253 = arith.divf %252, %154 : vector<4x1xf32>
    %254 = arith.subf %249, %253 : vector<4x1xf32>
    %cst_74 = arith.constant dense<0.000000e+00> : vector<1xf32>
    %255 = vector.multi_reduction <add>, %254, %cst_74 [0] : vector<4x1xf32> to vector<1xf32>
    %256 = vector.shape_cast %255 : vector<1xf32> to vector<1x1xf32>
    %cst_75 = arith.constant 4.000000e+00 : f32
    %257 = vector.broadcast %cst_75 : f32 to vector<1x1xf32>
    %258 = arith.divf %256, %257 : vector<1x1xf32>
    %259 = arith.addf %180, %206 : vector<1x1xf32>
    %260 = arith.addf %232, %258 : vector<1x1xf32>
    %c0_76 = arith.constant 0 : index
    %c0_77 = arith.constant 0 : index
    %261 = vector.load %arg0[%c0_76, %c0_77] : memref<1x2xf32, #tpu.memory_space<vmem>>, vector<1x1xf32>
    %c0_78 = arith.constant 0 : index
    %c1 = arith.constant 1 : index
    %262 = vector.load %arg0[%c0_78, %c1] : memref<1x2xf32, #tpu.memory_space<vmem>>, vector<1x1xf32>
    %cst_79 = arith.constant 0.000000e+00 : f32
    %263 = vector.broadcast %cst_79 : f32 to vector<1x1xf32>
    %cst_80 = arith.constant 0.000000e+00 : f32
    %264 = vector.broadcast %cst_80 : f32 to vector<1x1xf32>
    %cst_81 = arith.constant 0.000000e+00 : f32
    %265 = vector.broadcast %cst_81 : f32 to vector<1x1xf32>
    %cst_82 = arith.constant 1.000000e+00 : f32
    %266 = vector.broadcast %cst_82 : f32 to vector<1x1xf32>
    %267 = arith.mulf %266, %259 : vector<1x1xf32>
    %cst_83 = arith.constant 1.000000e+00 : f32
    %268 = vector.broadcast %cst_83 : f32 to vector<1x1xf32>
    %269 = arith.mulf %268, %260 : vector<1x1xf32>
    %270 = arith.addf %267, %269 : vector<1x1xf32>
    %271 = arith.mulf %261, %263 : vector<1x1xf32>
    %272 = arith.addf %270, %271 : vector<1x1xf32>
    %273 = arith.mulf %262, %129 : vector<1x1xf32>
    %274 = arith.addf %272, %273 : vector<1x1xf32>
    %275 = tpu.iota {dimensions = array<i32: 1>} : vector<1x128xi32>
    %cst_84 = arith.constant 0.000000e+00 : f32
    %276 = vector.broadcast %cst_84 : f32 to vector<1x128xf32>
    %c0_i32 = arith.constant 0 : i32
    %277 = vector.broadcast %c0_i32 : i32 to vector<1x128xi32>
    %278 = arith.cmpi eq, %275, %277 : vector<1x128xi32>
    %279 = vector.shape_cast %274 : vector<1x1xf32> to vector<1x1xf32>
    %280 = vector.broadcast %279 : vector<1x1xf32> to vector<1x128xf32>
    %281 = arith.select %278, %280, %276 : vector<1x128xi1>, vector<1x128xf32>
    %c1_i32 = arith.constant 1 : i32
    %282 = vector.broadcast %c1_i32 : i32 to vector<1x128xi32>
    %283 = arith.cmpi eq, %275, %282 : vector<1x128xi32>
    %284 = vector.shape_cast %263 : vector<1x1xf32> to vector<1x1xf32>
    %285 = vector.broadcast %284 : vector<1x1xf32> to vector<1x128xf32>
    %286 = arith.select %283, %285, %281 : vector<1x128xi1>, vector<1x128xf32>
    %c2_i32 = arith.constant 2 : i32
    %287 = vector.broadcast %c2_i32 : i32 to vector<1x128xi32>
    %288 = arith.cmpi eq, %275, %287 : vector<1x128xi32>
    %289 = vector.shape_cast %129 : vector<1x1xf32> to vector<1x1xf32>
    %290 = vector.broadcast %289 : vector<1x1xf32> to vector<1x128xf32>
    %291 = arith.select %288, %290, %286 : vector<1x128xi1>, vector<1x128xf32>
    %c3_i32 = arith.constant 3 : i32
    %292 = vector.broadcast %c3_i32 : i32 to vector<1x128xi32>
    %293 = arith.cmpi eq, %275, %292 : vector<1x128xi32>
    %294 = vector.shape_cast %259 : vector<1x1xf32> to vector<1x1xf32>
    %295 = vector.broadcast %294 : vector<1x1xf32> to vector<1x128xf32>
    %296 = arith.select %293, %295, %291 : vector<1x128xi1>, vector<1x128xf32>
    %c4_i32 = arith.constant 4 : i32
    %297 = vector.broadcast %c4_i32 : i32 to vector<1x128xi32>
    %298 = arith.cmpi eq, %275, %297 : vector<1x128xi32>
    %299 = vector.shape_cast %260 : vector<1x1xf32> to vector<1x1xf32>
    %300 = vector.broadcast %299 : vector<1x1xf32> to vector<1x128xf32>
    %301 = arith.select %298, %300, %296 : vector<1x128xi1>, vector<1x128xf32>
    %c5_i32 = arith.constant 5 : i32
    %302 = vector.broadcast %c5_i32 : i32 to vector<1x128xi32>
    %303 = arith.cmpi eq, %275, %302 : vector<1x128xi32>
    %304 = vector.shape_cast %264 : vector<1x1xf32> to vector<1x1xf32>
    %305 = vector.broadcast %304 : vector<1x1xf32> to vector<1x128xf32>
    %306 = arith.select %303, %305, %301 : vector<1x128xi1>, vector<1x128xf32>
    %c6_i32 = arith.constant 6 : i32
    %307 = vector.broadcast %c6_i32 : i32 to vector<1x128xi32>
    %308 = arith.cmpi eq, %275, %307 : vector<1x128xi32>
    %309 = vector.shape_cast %265 : vector<1x1xf32> to vector<1x1xf32>
    %310 = vector.broadcast %309 : vector<1x1xf32> to vector<1x128xf32>
    %311 = arith.select %308, %310, %306 : vector<1x128xi1>, vector<1x128xf32>
    %c0_85 = arith.constant 0 : index
    %c0_86 = arith.constant 0 : index
    %312 = vector.load %arg16[%c0_85, %c0_86] : memref<1x128xf32, #tpu.memory_space<vmem>>, vector<1x128xf32>
    tpu.vector_store %arg16[%c0_85, %c0_86], %311 {strides = array<i32>} : memref<1x128xf32, #tpu.memory_space<vmem>>, vector<1x128xf32>,
    return
  }
}

</mosaic_0001>

<llo_original>
// kernel: vgvae_forward.1
$region0: #{vgvae_forward.1}
  #allocation0 [shape = 'u32[]', space=smem, size = 0x4, offset = 0x4, fixed_abs, tag = 'smem constant byte address 0x4 - core index']
  #allocation1 [shape = 'u32[144,128]{1,0:T(1,128)}', space=vmem, size = 0x12000, scoped, tag = 'internal scratch']
  %s0 = inlined_call_operand.vmem [shape: f32[1,2], index: 0, kind: input, shape index: {}]
  %s1 = inlined_call_operand.vmem [shape: s32[16,8], index: 1, kind: input, shape index: {}]
  %s2 = inlined_call_operand.vmem [shape: f32[16,8], index: 2, kind: input, shape index: {}]
  %s3 = inlined_call_operand.vmem [shape: f32[128,32], index: 3, kind: input, shape index: {}]
  %s4 = inlined_call_operand.vmem [shape: f32[128,32], index: 4, kind: input, shape index: {}]
  %s5 = inlined_call_operand.vmem [shape: f32[32,128], index: 5, kind: input, shape index: {}]
  %s6 = inlined_call_operand.vmem [shape: f32[32,128], index: 6, kind: input, shape index: {}]
  %s7 = inlined_call_operand.vmem [shape: f32[1,128], index: 7, kind: input, shape index: {}]
  %s8 = inlined_call_operand.vmem [shape: f32[128,64], index: 8, kind: input, shape index: {}]
  %s9 = inlined_call_operand.vmem [shape: f32[1,64], index: 9, kind: input, shape index: {}]
  %s10 = inlined_call_operand.vmem [shape: f32[16,32], index: 10, kind: input, shape index: {}]
  %s11 = inlined_call_operand.vmem [shape: f32[16,32], index: 11, kind: input, shape index: {}]
  %s12 = inlined_call_operand.vmem [shape: f32[1,32], index: 12, kind: input, shape index: {}]
  %s13 = inlined_call_operand.vmem [shape: f32[32,128], index: 13, kind: input, shape index: {}]
  %s14 = inlined_call_operand.vmem [shape: f32[1,128], index: 14, kind: input, shape index: {}]
  %s15 = inlined_call_operand.vmem [shape: f32[8,16], index: 15, kind: input, shape index: {}]
  %s16 = inlined_call_operand.vmem [shape: f32[1,128], index: 16, kind: output, shape index: {}]
  %s17 = sld [smem:[#allocation0]]
  $region74: #{vgvae_forward.1} parent=0
    _
  %s19 = ssub.s32 1, %s17
  %s20 = scalar_select 0, %s19, %s17
  // Predicated region
  $region2: #{vgvae_forward.1} parent=0 // pred_check
    _
  $region3: #{vgvae_forward.1} parent=0 // pred_check_branch
    %22 = sbr.rel (0) target = $region5
  $region4: #{vgvae_forward.1} parent=0 // pred_region
    _
  $region5: #{vgvae_forward.1} parent=0 // pred_fallthru
    _
  // Predicated region
  $region6: #{vgvae_forward.1} parent=0 // pred_check
    _
  $region7: #{vgvae_forward.1} parent=0 // pred_check_branch
    %24 = sbr.rel (0) target = $region9
  $region8: #{vgvae_forward.1} parent=0 // pred_region
    _
  $region9: #{vgvae_forward.1} parent=0 // pred_fallthru
    _
  // Predicated region
  $region10: #{vgvae_forward.1} parent=0 // pred_check
    _
  $region11: #{vgvae_forward.1} parent=0 // pred_check_branch
    %26 = sbr.rel (0) target = $region13
  $region12: #{vgvae_forward.1} parent=0 // pred_region
    _
  $region13: #{vgvae_forward.1} parent=0 // pred_fallthru
    _
  // Predicated region
  $region14: #{vgvae_forward.1} parent=0 // pred_check
    _
  $region15: #{vgvae_forward.1} parent=0 // pred_check_branch
    %28 = sbr.rel (0) target = $region17
  $region16: #{vgvae_forward.1} parent=0 // pred_region
    _
  $region17: #{vgvae_forward.1} parent=0 // pred_fallthru
    _
  // Predicated region
  $region18: #{vgvae_forward.1} parent=0 // pred_check
    _
  $region19: #{vgvae_forward.1} parent=0 // pred_check_branch
    %30 = sbr.rel (0) target = $region21
  $region20: #{vgvae_forward.1} parent=0 // pred_region
    _
  $region21: #{vgvae_forward.1} parent=0 // pred_fallthru
    _
  // Predicated region
  $region22: #{vgvae_forward.1} parent=0 // pred_check
    _
  $region23: #{vgvae_forward.1} parent=0 // pred_check_branch
    %32 = sbr.rel (0) target = $region25
  $region24: #{vgvae_forward.1} parent=0 // pred_region
    _
  $region25: #{vgvae_forward.1} parent=0 // pred_fallthru
    _
  // Predicated region
  $region26: #{vgvae_forward.1} parent=0 // pred_check
    _
  $region27: #{vgvae_forward.1} parent=0 // pred_check_branch
    %34 = sbr.rel (0) target = $region29
  $region28: #{vgvae_forward.1} parent=0 // pred_region
    _
  $region29: #{vgvae_forward.1} parent=0 // pred_fallthru
    _
  // Predicated region
  $region30: #{vgvae_forward.1} parent=0 // pred_check
    _
  $region31: #{vgvae_forward.1} parent=0 // pred_check_branch
    %36 = sbr.rel (0) target = $region33
  $region32: #{vgvae_forward.1} parent=0 // pred_region
    _
  $region33: #{vgvae_forward.1} parent=0 // pred_fallthru
    _
  // Predicated region
  $region34: #{vgvae_forward.1} parent=0 // pred_check
    _
  $region35: #{vgvae_forward.1} parent=0 // pred_check_branch
    %38 = sbr.rel (0) target = $region37
  $region36: #{vgvae_forward.1} parent=0 // pred_region
    _
  $region37: #{vgvae_forward.1} parent=0 // pred_fallthru
    _
  // Predicated region
  $region38: #{vgvae_forward.1} parent=0 // pred_check
    _
  $region39: #{vgvae_forward.1} parent=0 // pred_check_branch
    %40 = sbr.rel (0) target = $region41
  $region40: #{vgvae_forward.1} parent=0 // pred_region
    _
  $region41: #{vgvae_forward.1} parent=0 // pred_fallthru
    _
  // Predicated region
  $region42: #{vgvae_forward.1} parent=0 // pred_check
    _
  $region43: #{vgvae_forward.1} parent=0 // pred_check_branch
    %42 = sbr.rel (0) target = $region45
  $region44: #{vgvae_forward.1} parent=0 // pred_region
    _
  $region45: #{vgvae_forward.1} parent=0 // pred_fallthru
    _
  // Predicated region
  $region46: #{vgvae_forward.1} parent=0 // pred_check
    _
  $region47: #{vgvae_forward.1} parent=0 // pred_check_branch
    %44 = sbr.rel (0) target = $region49
  $region48: #{vgvae_forward.1} parent=0 // pred_region
    _
  $region49: #{vgvae_forward.1} parent=0 // pred_fallthru
    _
  // Predicated region
  $region50: #{vgvae_forward.1} parent=0 // pred_check
    _
  $region51: #{vgvae_forward.1} parent=0 // pred_check_branch
    %46 = sbr.rel (0) target = $region53
  $region52: #{vgvae_forward.1} parent=0 // pred_region
    _
  $region53: #{vgvae_forward.1} parent=0 // pred_fallthru
    _
  // Predicated region
  $region54: #{vgvae_forward.1} parent=0 // pred_check
    _
  $region55: #{vgvae_forward.1} parent=0 // pred_check_branch
    %48 = sbr.rel (0) target = $region57
  $region56: #{vgvae_forward.1} parent=0 // pred_region
    _
  $region57: #{vgvae_forward.1} parent=0 // pred_fallthru
    _
  // Predicated region
  $region58: #{vgvae_forward.1} parent=0 // pred_check
    _
  $region59: #{vgvae_forward.1} parent=0 // pred_check_branch
    %50 = sbr.rel (0) target = $region61
  $region60: #{vgvae_forward.1} parent=0 // pred_region
    _
  $region61: #{vgvae_forward.1} parent=0 // pred_fallthru
    _
  // Predicated region
  $region62: #{vgvae_forward.1} parent=0 // pred_check
    _
  $region63: #{vgvae_forward.1} parent=0 // pred_check_branch
    %52 = sbr.rel (0) target = $region65
  $region64: #{vgvae_forward.1} parent=0 // pred_region
    _
  $region65: #{vgvae_forward.1} parent=0 // pred_fallthru
    _
  %v53 = vld [vmem:[%s1] sm:$0xff]
  %v54 = vld [vmem:[%s1 + $0x8] sm:$0xff]
  %v55 = vld [vmem:[%s2] sm:$0xff]
  %v56 = vld [vmem:[%s2 + $0x8] sm:$0xff]
  %v57 = vlaneseq
  %v58 = vand.u32 %v57, 127
  %59 = vset.pattern.permute.xlu0 0
  %60 = vperm.xlu0 %59, %v53
  %v61 = vpop.permute.xlu0 %60
  %62 = vset.pattern.permute.xlu0 0
  %63 = vperm.xlu0 %62, %v54
  %v64 = vpop.permute.xlu0 %63
  %vm65 = vcmp.eq.s32.totalorder %v61, %v58
  %vm66 = vcmp.eq.s32.totalorder %v64, %v58
  %v67 = vsel %vm65, 1, 0
  %v68 = vsel %vm66, 1, 0
  %v69 = vcvt.s32.f32 %v67
  %v70 = vcvt.s32.f32 %v68
  %72 = vset.pattern.permute.xlu0 0
  %73 = vperm.xlu0 %72, %v55
  %v74 = vpop.permute.xlu0 %73
  %77 = vset.pattern.permute.xlu0 0
  %78 = vperm.xlu0 %77, %v56
  %v79 = vpop.permute.xlu0 %78
  %v81 = vmul.f32 %v69, %v74
  %v82 = vmul.f32 %v70, %v79
  %v83 = vadd.f32 %v81, 0.0
  %v84 = vadd.f32 %v82, 0.0
  %85 = vset.pattern.permute.xlu0 1
  %86 = vperm.xlu0 %85, %v53
  %v87 = vpop.permute.xlu0 %86
  %88 = vset.pattern.permute.xlu0 1
  %89 = vperm.xlu0 %88, %v54
  %v90 = vpop.permute.xlu0 %89
  %vm91 = vcmp.eq.s32.totalorder %v87, %v58
  %vm92 = vcmp.eq.s32.totalorder %v90, %v58
  %v93 = vsel %vm91, 1, 0
  %v94 = vsel %vm92, 1, 0
  %v95 = vcvt.s32.f32 %v93
  %v96 = vcvt.s32.f32 %v94
  %97 = vset.pattern.permute.xlu0 1
  %98 = vperm.xlu0 %97, %v55
  %v99 = vpop.permute.xlu0 %98
  %101 = vset.pattern.permute.xlu0 1
  %102 = vperm.xlu0 %101, %v56
  %v103 = vpop.permute.xlu0 %102
  %v105 = vmul.f32 %v95, %v99
  %v106 = vmul.f32 %v96, %v103
  %v107 = vadd.f32 %v83, %v105
  %v108 = vadd.f32 %v84, %v106
  %109 = vset.pattern.permute.xlu0 2
  %110 = vperm.xlu0 %109, %v53
  %v111 = vpop.permute.xlu0 %110
  %112 = vset.pattern.permute.xlu0 2
  %113 = vperm.xlu0 %112, %v54
  %v114 = vpop.permute.xlu0 %113
  %vm115 = vcmp.eq.s32.totalorder %v111, %v58
  %vm116 = vcmp.eq.s32.totalorder %v114, %v58
  %v117 = vsel %vm115, 1, 0
  %v118 = vsel %vm116, 1, 0
  %v119 = vcvt.s32.f32 %v117
  %v120 = vcvt.s32.f32 %v118
  %121 = vset.pattern.permute.xlu0 2
  %122 = vperm.xlu0 %121, %v55
  %v123 = vpop.permute.xlu0 %122
  %125 = vset.pattern.permute.xlu0 2
  %126 = vperm.xlu0 %125, %v56
  %v127 = vpop.permute.xlu0 %126
  %v129 = vmul.f32 %v119, %v123
  %v130 = vmul.f32 %v120, %v127
  %v131 = vadd.f32 %v107, %v129
  %v132 = vadd.f32 %v108, %v130
  %133 = vset.pattern.permute.xlu0 3
  %134 = vperm.xlu0 %133, %v53
  %v135 = vpop.permute.xlu0 %134
  %136 = vset.pattern.permute.xlu0 3
  %137 = vperm.xlu0 %136, %v54
  %v138 = vpop.permute.xlu0 %137
  %vm139 = vcmp.eq.s32.totalorder %v135, %v58
  %vm140 = vcmp.eq.s32.totalorder %v138, %v58
  %v141 = vsel %vm139, 1, 0
  %v142 = vsel %vm140, 1, 0
  %v143 = vcvt.s32.f32 %v141
  %v144 = vcvt.s32.f32 %v142
  %145 = vset.pattern.permute.xlu0 3
  %146 = vperm.xlu0 %145, %v55
  %v147 = vpop.permute.xlu0 %146
  %149 = vset.pattern.permute.xlu0 3
  %150 = vperm.xlu0 %149, %v56
  %v151 = vpop.permute.xlu0 %150
  %v153 = vmul.f32 %v143, %v147
  %v154 = vmul.f32 %v144, %v151
  %v155 = vadd.f32 %v131, %v153
  %v156 = vadd.f32 %v132, %v154
  %157 = vset.pattern.permute.xlu0 4
  %158 = vperm.xlu0 %157, %v53
  %v159 = vpop.permute.xlu0 %158
  %160 = vset.pattern.permute.xlu0 4
  %161 = vperm.xlu0 %160, %v54
  %v162 = vpop.permute.xlu0 %161
  %vm163 = vcmp.eq.s32.totalorder %v159, %v58
  %vm164 = vcmp.eq.s32.totalorder %v162, %v58
  %v165 = vsel %vm163, 1, 0
  %v166 = vsel %vm164, 1, 0
  %v167 = vcvt.s32.f32 %v165
  %v168 = vcvt.s32.f32 %v166
  %169 = vset.pattern.permute.xlu0 4
  %170 = vperm.xlu0 %169, %v55
  %v171 = vpop.permute.xlu0 %170
  %173 = vset.pattern.permute.xlu0 4
  %174 = vperm.xlu0 %173, %v56
  %v175 = vpop.permute.xlu0 %174
  %v177 = vmul.f32 %v167, %v171
  %v178 = vmul.f32 %v168, %v175
  %v179 = vadd.f32 %v155, %v177
  %v180 = vadd.f32 %v156, %v178
  %181 = vset.pattern.permute.xlu0 5
  %182 = vperm.xlu0 %181, %v53
  %v183 = vpop.permute.xlu0 %182
  %184 = vset.pattern.permute.xlu0 5
  %185 = vperm.xlu0 %184, %v54
  %v186 = vpop.permute.xlu0 %185
  %vm187 = vcmp.eq.s32.totalorder %v183, %v58
  %vm188 = vcmp.eq.s32.totalorder %v186, %v58
  %v189 = vsel %vm187, 1, 0
  %v190 = vsel %vm188, 1, 0
  %v191 = vcvt.s32.f32 %v189
  %v192 = vcvt.s32.f32 %v190
  %193 = vset.pattern.permute.xlu0 5
  %194 = vperm.xlu0 %193, %v55
  %v195 = vpop.permute.xlu0 %194
  %197 = vset.pattern.permute.xlu0 5
  %198 = vperm.xlu0 %197, %v56
  %v199 = vpop.permute.xlu0 %198
  %v201 = vmul.f32 %v191, %v195
  %v202 = vmul.f32 %v192, %v199
  %v203 = vadd.f32 %v179, %v201
  %v204 = vadd.f32 %v180, %v202
  %205 = vset.pattern.permute.xlu0 6
  %206 = vperm.xlu0 %205, %v53
  %v207 = vpop.permute.xlu0 %206
  %208 = vset.pattern.permute.xlu0 6
  %209 = vperm.xlu0 %208, %v54
  %v210 = vpop.permute.xlu0 %209
  %vm211 = vcmp.eq.s32.totalorder %v207, %v58
  %vm212 = vcmp.eq.s32.totalorder %v210, %v58
  %v213 = vsel %vm211, 1, 0
  %v214 = vsel %vm212, 1, 0
  %v215 = vcvt.s32.f32 %v213
  %v216 = vcvt.s32.f32 %v214
  %217 = vset.pattern.permute.xlu0 6
  %218 = vperm.xlu0 %217, %v55
  %v219 = vpop.permute.xlu0 %218
  %221 = vset.pattern.permute.xlu0 6
  %222 = vperm.xlu0 %221, %v56
  %v223 = vpop.permute.xlu0 %222
  %v225 = vmul.f32 %v215, %v219
  %v226 = vmul.f32 %v216, %v223
  %v227 = vadd.f32 %v203, %v225
  %v228 = vadd.f32 %v204, %v226
  %229 = vset.pattern.permute.xlu0 7
  %230 = vperm.xlu0 %229, %v53
  %v231 = vpop.permute.xlu0 %230
  %232 = vset.pattern.permute.xlu0 7
  %233 = vperm.xlu0 %232, %v54
  %v234 = vpop.permute.xlu0 %233
  %vm235 = vcmp.eq.s32.totalorder %v231, %v58
  %vm236 = vcmp.eq.s32.totalorder %v234, %v58
  %v237 = vsel %vm235, 1, 0
  %v238 = vsel %vm236, 1, 0
  %v239 = vcvt.s32.f32 %v237
  %v240 = vcvt.s32.f32 %v238
  %241 = vset.pattern.permute.xlu0 7
  %242 = vperm.xlu0 %241, %v55
  %v243 = vpop.permute.xlu0 %242
  %245 = vset.pattern.permute.xlu0 7
  %246 = vperm.xlu0 %245, %v56
  %v247 = vpop.permute.xlu0 %246
  %v249 = vmul.f32 %v239, %v243
  %v250 = vmul.f32 %v240, %v247
  %v251 = vadd.f32 %v227, %v249
  %v252 = vadd.f32 %v228, %v250
  %vm253 = vcmask 64512
  %v254 = vsel %vm253, %v55, 0.0
  %255 = vadd.xlane.f32.xlu0 %v254
  %v256 = vpop.xlane.xlu0 %255
  %v257 = vsel %vm253, %v56, 0.0
  %258 = vadd.xlane.f32.xlu0 %v257
  %v259 = vpop.xlane.xlu0 %258
  %v260 = vmax.f32 %v256, 1e-08
  %v261 = vld [vmem:[%s3] sm:$0xff]
  %v262 = vld [vmem:[%s3 + $0x8] sm:$0xff]
  %v263 = vld [vmem:[%s3 + $0x10] sm:$0xff]
  %v264 = vld [vmem:[%s3 + $0x18] sm:$0xff]
  %v265 = vld [vmem:[%s3 + $0x20] sm:$0xff]
  %v266 = vld [vmem:[%s3 + $0x28] sm:$0xff]
  %v267 = vld [vmem:[%s3 + $0x30] sm:$0xff]
  %v268 = vld [vmem:[%s3 + $0x38] sm:$0xff]
  %v269 = vld [vmem:[%s3 + $0x40] sm:$0xff]
  %v270 = vld [vmem:[%s3 + $0x48] sm:$0xff]
  %v271 = vld [vmem:[%s3 + $0x50] sm:$0xff]
  %v272 = vld [vmem:[%s3 + $0x58] sm:$0xff]
  %v273 = vld [vmem:[%s3 + $0x60] sm:$0xff]
  %v274 = vld [vmem:[%s3 + $0x68] sm:$0xff]
  %v275 = vld [vmem:[%s3 + $0x70] sm:$0xff]
  %v276 = vld [vmem:[%s3 + $0x78] sm:$0xff]
  %277 = vmatprep.subr.mxu0 0.0
  %278 = vmatpush1.msra.mxu0 %v276
  %279 = vmatprep.subr.mxu0 0.0
  %280 = vmatpush1.msra.mxu0 %v275
  %281 = vmatprep.subr.mxu0 0.0
  %282 = vmatpush1.msra.mxu0 %v274
  %283 = vmatprep.subr.mxu0 0.0
  %284 = vmatpush1.msra.mxu0 %v273
  %285 = vmatprep.subr.mxu0 0.0
  %286 = vmatpush1.msra.mxu0 %v272
  %287 = vmatprep.subr.mxu0 0.0
  %288 = vmatpush1.msra.mxu0 %v271
  %289 = vmatprep.subr.mxu0 0.0
  %290 = vmatpush1.msra.mxu0 %v270
  %291 = vmatprep.subr.mxu0 0.0
  %292 = vmatpush1.msra.mxu0 %v269
  %293 = vmatprep.subr.mxu0 0.0
  %294 = vmatpush1.msra.mxu0 %v268
  %295 = vmatprep.subr.mxu0 0.0
  %296 = vmatpush1.msra.mxu0 %v267
  %297 = vmatprep.subr.mxu0 0.0
  %298 = vmatpush1.msra.mxu0 %v266
  %299 = vmatprep.subr.mxu0 0.0
  %300 = vmatpush1.msra.mxu0 %v265
  %301 = vmatprep.subr.mxu0 0.0
  %302 = vmatpush1.msra.mxu0 %v264
  %303 = vmatprep.subr.mxu0 0.0
  %304 = vmatpush1.msra.mxu0 %v263
  %305 = vmatprep.subr.mxu0 0.0
  %306 = vmatpush1.msra.mxu0 %v262
  %307 = vmatprep.subr.mxu0 0.0
  %308 = vmatpush1.msra.mxu0 %v261
  %309 = vmatprep.subr.mxu0 0.0
  %310 = vmatpush2.msra.mxu0 0.0
  %311 = vmatprep.subr.mxu0 0.0
  %312 = vmatpush2.msra.mxu0 0.0
  %313 = vmatprep.subr.mxu0 0.0
  %314 = vmatpush2.msra.mxu0 0.0
  %315 = vmatprep.subr.mxu0 0.0
  %316 = vmatpush2.msra.mxu0 0.0
  %317 = vmatprep.subr.mxu0 0.0
  %318 = vmatpush2.msra.mxu0 0.0
  %319 = vmatprep.subr.mxu0 0.0
  %320 = vmatpush2.msra.mxu0 0.0
  %321 = vmatprep.subr.mxu0 0.0
  %322 = vmatpush2.msra.mxu0 0.0
  %323 = vmatprep.subr.mxu0 0.0
  %324 = vmatpush2.msra.mxu0 0.0
  %325 = vmatprep.subr.mxu0 0.0
  %326 = vmatpush2.msra.mxu0 0.0
  %327 = vmatprep.subr.mxu0 0.0
  %328 = vmatpush2.msra.mxu0 0.0
  %329 = vmatprep.subr.mxu0 0.0
  %330 = vmatpush2.msra.mxu0 0.0
  %331 = vmatprep.subr.mxu0 0.0
  %332 = vmatpush2.msra.mxu0 0.0
  %333 = vmatprep.subr.mxu0 0.0
  %334 = vmatpush2.msra.mxu0 0.0
  %335 = vmatprep.subr.mxu0 0.0
  %336 = vmatpush2.msra.mxu0 0.0
  %337 = vmatprep.subr.mxu0 0.0
  %338 = vmatpush2.msra.mxu0 0.0
  %339 = vmatprep.subr.mxu0 0.0
  %340 = vmatpush2.msra.mxu0 0.0
  %341 = vmatprep.mubr.f32.mxu0 0.0
  %342 = vmatmul.mubr.f32.gmra.mxu0 %v251
  %v343 = vpop.f32.mrf.mxu0
  %v344 = vadd.f32 0.0, %v343
  %v345 = vpop.f32.mrf.mxu0
  %346 = vdwg.mxu0
  %v347 = vrcp.pop %v260
  %v348 = vmul.f32 %v344, %v347
  %v349 = vld [vmem:[%s4] sm:$0xff]
  %v350 = vld [vmem:[%s4 + $0x8] sm:$0xff]
  %v351 = vld [vmem:[%s4 + $0x10] sm:$0xff]
  %v352 = vld [vmem:[%s4 + $0x18] sm:$0xff]
  %v353 = vld [vmem:[%s4 + $0x20] sm:$0xff]
  %v354 = vld [vmem:[%s4 + $0x28] sm:$0xff]
  %v355 = vld [vmem:[%s4 + $0x30] sm:$0xff]
  %v356 = vld [vmem:[%s4 + $0x38] sm:$0xff]
  %v357 = vld [vmem:[%s4 + $0x40] sm:$0xff]
  %v358 = vld [vmem:[%s4 + $0x48] sm:$0xff]
  %v359 = vld [vmem:[%s4 + $0x50] sm:$0xff]
  %v360 = vld [vmem:[%s4 + $0x58] sm:$0xff]
  %v361 = vld [vmem:[%s4 + $0x60] sm:$0xff]
  %v362 = vld [vmem:[%s4 + $0x68] sm:$0xff]
  %v363 = vld [vmem:[%s4 + $0x70] sm:$0xff]
  %v364 = vld [vmem:[%s4 + $0x78] sm:$0xff]
  %365 = vmatprep.subr.mxu0 0.0
  %366 = vmatpush1.msra.mxu0 %v364
  %367 = vmatprep.subr.mxu0 0.0
  %368 = vmatpush1.msra.mxu0 %v363
  %369 = vmatprep.subr.mxu0 0.0
  %370 = vmatpush1.msra.mxu0 %v362
  %371 = vmatprep.subr.mxu0 0.0
  %372 = vmatpush1.msra.mxu0 %v361
  %373 = vmatprep.subr.mxu0 0.0
  %374 = vmatpush1.msra.mxu0 %v360
  %375 = vmatprep.subr.mxu0 0.0
  %376 = vmatpush1.msra.mxu0 %v359
  %377 = vmatprep.subr.mxu0 0.0
  %378 = vmatpush1.msra.mxu0 %v358
  %379 = vmatprep.subr.mxu0 0.0
  %380 = vmatpush1.msra.mxu0 %v357
  %381 = vmatprep.subr.mxu0 0.0
  %382 = vmatpush1.msra.mxu0 %v356
  %383 = vmatprep.subr.mxu0 0.0
  %384 = vmatpush1.msra.mxu0 %v355
  %385 = vmatprep.subr.mxu0 0.0
  %386 = vmatpush1.msra.mxu0 %v354
  %387 = vmatprep.subr.mxu0 0.0
  %388 = vmatpush1.msra.mxu0 %v353
  %389 = vmatprep.subr.mxu0 0.0
  %390 = vmatpush1.msra.mxu0 %v352
  %391 = vmatprep.subr.mxu0 0.0
  %392 = vmatpush1.msra.mxu0 %v351
  %393 = vmatprep.subr.mxu0 0.0
  %394 = vmatpush1.msra.mxu0 %v350
  %395 = vmatprep.subr.mxu0 0.0
  %396 = vmatpush1.msra.mxu0 %v349
  %397 = vmatprep.subr.mxu0 0.0
  %398 = vmatpush2.msra.mxu0 0.0
  %399 = vmatprep.subr.mxu0 0.0
  %400 = vmatpush2.msra.mxu0 0.0
  %401 = vmatprep.subr.mxu0 0.0
  %402 = vmatpush2.msra.mxu0 0.0
  %403 = vmatprep.subr.mxu0 0.0
  %404 = vmatpush2.msra.mxu0 0.0
  %405 = vmatprep.subr.mxu0 0.0
  %406 = vmatpush2.msra.mxu0 0.0
  %407 = vmatprep.subr.mxu0 0.0
  %408 = vmatpush2.msra.mxu0 0.0
  %409 = vmatprep.subr.mxu0 0.0
  %410 = vmatpush2.msra.mxu0 0.0
  %411 = vmatprep.subr.mxu0 0.0
  %412 = vmatpush2.msra.mxu0 0.0
  %413 = vmatprep.subr.mxu0 0.0
  %414 = vmatpush2.msra.mxu0 0.0
  %415 = vmatprep.subr.mxu0 0.0
  %416 = vmatpush2.msra.mxu0 0.0
  %417 = vmatprep.subr.mxu0 0.0
  %418 = vmatpush2.msra.mxu0 0.0
  %419 = vmatprep.subr.mxu0 0.0
  %420 = vmatpush2.msra.mxu0 0.0
  %421 = vmatprep.subr.mxu0 0.0
  %422 = vmatpush2.msra.mxu0 0.0
  %423 = vmatprep.subr.mxu0 0.0
  %424 = vmatpush2.msra.mxu0 0.0
  %425 = vmatprep.subr.mxu0 0.0
  %426 = vmatpush2.msra.mxu0 0.0
  %427 = vmatprep.subr.mxu0 0.0
  %428 = vmatpush2.msra.mxu0 0.0
  %429 = vmatprep.mubr.f32.mxu0 0.0
  %430 = vmatmul.mubr.f32.gmra.mxu0 %v251
  %v431 = vpop.f32.mrf.mxu0
  %v432 = vadd.f32 0.0, %v431
  %v433 = vpop.f32.mrf.mxu0
  %434 = vdwg.mxu0
  %v435 = vmul.f32 %v432, %v347
  %v436 = vld [vmem:[%s5] sm:$0xff]
  %v437 = vld [vmem:[%s5 + $0x8] sm:$0xff]
  %v438 = vld [vmem:[%s5 + $0x10] sm:$0xff]
  %v439 = vld [vmem:[%s5 + $0x18] sm:$0xff]
  %v440 = vld [vmem:[%s6] sm:$0xff]
  %v441 = vld [vmem:[%s6 + $0x8] sm:$0xff]
  %v442 = vld [vmem:[%s6 + $0x10] sm:$0xff]
  %v443 = vld [vmem:[%s6 + $0x18] sm:$0xff]
  %vm444 = vcmask 261120
  %v446 = vsel %vm444, %v435, 0
  %448 = vmatprep.subr.mxu0 0.0
  %449 = vmatpush1.msra.mxu0 0.0
  %450 = vmatprep.subr.mxu0 0.0
  %451 = vmatpush1.msra.mxu0 0.0
  %452 = vmatprep.subr.mxu0 0.0
  %453 = vmatpush1.msra.mxu0 0.0
  %454 = vmatprep.subr.mxu0 0.0
  %455 = vmatpush1.msra.mxu0 0.0
  %456 = vmatprep.subr.mxu0 0.0
  %457 = vmatpush1.msra.mxu0 0.0
  %458 = vmatprep.subr.mxu0 0.0
  %459 = vmatpush1.msra.mxu0 0.0
  %460 = vmatprep.subr.mxu0 0.0
  %461 = vmatpush1.msra.mxu0 0.0
  %462 = vmatprep.subr.mxu0 0.0
  %463 = vmatpush1.msra.mxu0 0.0
  %464 = vmatprep.subr.mxu0 0.0
  %465 = vmatpush1.msra.mxu0 0.0
  %466 = vmatprep.subr.mxu0 0.0
  %467 = vmatpush1.msra.mxu0 0.0
  %468 = vmatprep.subr.mxu0 0.0
  %469 = vmatpush1.msra.mxu0 0.0
  %470 = vmatprep.subr.mxu0 0.0
  %471 = vmatpush1.msra.mxu0 0.0
  %472 = vmatprep.subr.mxu0 0.0
  %473 = vmatpush1.msra.mxu0 %v443
  %474 = vmatprep.subr.mxu0 0.0
  %475 = vmatpush1.msra.mxu0 %v442
  %476 = vmatprep.subr.mxu0 0.0
  %477 = vmatpush1.msra.mxu0 %v441
  %478 = vmatprep.subr.mxu0 0.0
  %479 = vmatpush1.msra.mxu0 %v440
  %480 = vmatprep.subr.mxu0 0.0
  %481 = vmatpush2.msra.mxu0 0.0
  %482 = vmatprep.subr.mxu0 0.0
  %483 = vmatpush2.msra.mxu0 0.0
  %484 = vmatprep.subr.mxu0 0.0
  %485 = vmatpush2.msra.mxu0 0.0
  %486 = vmatprep.subr.mxu0 0.0
  %487 = vmatpush2.msra.mxu0 0.0
  %488 = vmatprep.subr.mxu0 0.0
  %489 = vmatpush2.msra.mxu0 0.0
  %490 = vmatprep.subr.mxu0 0.0
  %491 = vmatpush2.msra.mxu0 0.0
  %492 = vmatprep.subr.mxu0 0.0
  %493 = vmatpush2.msra.mxu0 0.0
  %494 = vmatprep.subr.mxu0 0.0
  %495 = vmatpush2.msra.mxu0 0.0
  %496 = vmatprep.subr.mxu0 0.0
  %497 = vmatpush2.msra.mxu0 0.0
  %498 = vmatprep.subr.mxu0 0.0
  %499 = vmatpush2.msra.mxu0 0.0
  %500 = vmatprep.subr.mxu0 0.0
  %501 = vmatpush2.msra.mxu0 0.0
  %502 = vmatprep.subr.mxu0 0.0
  %503 = vmatpush2.msra.mxu0 0.0
  %504 = vmatprep.subr.mxu0 0.0
  %505 = vmatpush2.msra.mxu0 0.0
  %506 = vmatprep.subr.mxu0 0.0
  %507 = vmatpush2.msra.mxu0 0.0
  %508 = vmatprep.subr.mxu0 0.0
  %509 = vmatpush2.msra.mxu0 0.0
  %510 = vmatprep.subr.mxu0 0.0
  %511 = vmatpush2.msra.mxu0 0.0
  %512 = vmatprep.mubr.f32.mxu0 0.0
  %513 = vmatmul.mubr.f32.gmra.mxu0 %v446
  %v514 = vpop.f32.mrf.mxu0
  %v515 = vadd.f32 0.0, %v514
  %v516 = vpop.f32.mrf.mxu0
  %517 = vdwg.mxu0
  %v519 = vsel %vm444, %v348, 0
  %521 = vmatprep.subr.mxu0 0.0
  %522 = vmatpush1.msra.mxu0 0.0
  %523 = vmatprep.subr.mxu0 0.0
  %524 = vmatpush1.msra.mxu0 0.0
  %525 = vmatprep.subr.mxu0 0.0
  %526 = vmatpush1.msra.mxu0 0.0
  %527 = vmatprep.subr.mxu0 0.0
  %528 = vmatpush1.msra.mxu0 0.0
  %529 = vmatprep.subr.mxu0 0.0
  %530 = vmatpush1.msra.mxu0 0.0
  %531 = vmatprep.subr.mxu0 0.0
  %532 = vmatpush1.msra.mxu0 0.0
  %533 = vmatprep.subr.mxu0 0.0
  %534 = vmatpush1.msra.mxu0 0.0
  %535 = vmatprep.subr.mxu0 0.0
  %536 = vmatpush1.msra.mxu0 0.0
  %537 = vmatprep.subr.mxu0 0.0
  %538 = vmatpush1.msra.mxu0 0.0
  %539 = vmatprep.subr.mxu0 0.0
  %540 = vmatpush1.msra.mxu0 0.0
  %541 = vmatprep.subr.mxu0 0.0
  %542 = vmatpush1.msra.mxu0 0.0
  %543 = vmatprep.subr.mxu0 0.0
  %544 = vmatpush1.msra.mxu0 0.0
  %545 = vmatprep.subr.mxu0 0.0
  %546 = vmatpush1.msra.mxu0 %v439
  %547 = vmatprep.subr.mxu0 0.0
  %548 = vmatpush1.msra.mxu0 %v438
  %549 = vmatprep.subr.mxu0 0.0
  %550 = vmatpush1.msra.mxu0 %v437
  %551 = vmatprep.subr.mxu0 0.0
  %552 = vmatpush1.msra.mxu0 %v436
  %553 = vmatprep.subr.mxu0 0.0
  %554 = vmatpush2.msra.mxu0 0.0
  %555 = vmatprep.subr.mxu0 0.0
  %556 = vmatpush2.msra.mxu0 0.0
  %557 = vmatprep.subr.mxu0 0.0
  %558 = vmatpush2.msra.mxu0 0.0
  %559 = vmatprep.subr.mxu0 0.0
  %560 = vmatpush2.msra.mxu0 0.0
  %561 = vmatprep.subr.mxu0 0.0
  %562 = vmatpush2.msra.mxu0 0.0
  %563 = vmatprep.subr.mxu0 0.0
  %564 = vmatpush2.msra.mxu0 0.0
  %565 = vmatprep.subr.mxu0 0.0
  %566 = vmatpush2.msra.mxu0 0.0
  %567 = vmatprep.subr.mxu0 0.0
  %568 = vmatpush2.msra.mxu0 0.0
  %569 = vmatprep.subr.mxu0 0.0
  %570 = vmatpush2.msra.mxu0 0.0
  %571 = vmatprep.subr.mxu0 0.0
  %572 = vmatpush2.msra.mxu0 0.0
  %573 = vmatprep.subr.mxu0 0.0
  %574 = vmatpush2.msra.mxu0 0.0
  %575 = vmatprep.subr.mxu0 0.0
  %576 = vmatpush2.msra.mxu0 0.0
  %577 = vmatprep.subr.mxu0 0.0
  %578 = vmatpush2.msra.mxu0 0.0
  %579 = vmatprep.subr.mxu0 0.0
  %580 = vmatpush2.msra.mxu0 0.0
  %581 = vmatprep.subr.mxu0 0.0
  %582 = vmatpush2.msra.mxu0 0.0
  %583 = vmatprep.subr.mxu0 0.0
  %584 = vmatpush2.msra.mxu0 0.0
  %585 = vmatprep.mubr.f32.mxu0 0.0
  %586 = vmatmul.mubr.f32.gmra.mxu0 %v519
  %v587 = vpop.f32.mrf.mxu0
  %v588 = vadd.f32 %v515, %v587
  %v589 = vpop.f32.mrf.mxu0
  %590 = vdwg.mxu0
  %v591 = vld [vmem:[%s7] sm:$0x1]
  %v593 = vlaneseq
  %v594 = vshrl.u32 %v593, 7
  %v595 = vsub.s32 0, %v594
  %v596 = vrot.slane %v591, %v595
  %v598 = vadd.f32 %v588, %v596
  %v599 = vmax.f32 %v598, 0.0
  %v600 = vld [vmem:[%s8] sm:$0xff]
  %v601 = vld [vmem:[%s8 + $0x8] sm:$0xff]
  %v602 = vld [vmem:[%s8 + $0x10] sm:$0xff]
  %v603 = vld [vmem:[%s8 + $0x18] sm:$0xff]
  %v604 = vld [vmem:[%s8 + $0x20] sm:$0xff]
  %v605 = vld [vmem:[%s8 + $0x28] sm:$0xff]
  %v606 = vld [vmem:[%s8 + $0x30] sm:$0xff]
  %v607 = vld [vmem:[%s8 + $0x38] sm:$0xff]
  %v608 = vld [vmem:[%s8 + $0x40] sm:$0xff]
  %v609 = vld [vmem:[%s8 + $0x48] sm:$0xff]
  %v610 = vld [vmem:[%s8 + $0x50] sm:$0xff]
  %v611 = vld [vmem:[%s8 + $0x58] sm:$0xff]
  %v612 = vld [vmem:[%s8 + $0x60] sm:$0xff]
  %v613 = vld [vmem:[%s8 + $0x68] sm:$0xff]
  %v614 = vld [vmem:[%s8 + $0x70] sm:$0xff]
  %v615 = vld [vmem:[%s8 + $0x78] sm:$0xff]
  %v616 = vld [vmem:[%s9] sm:$0x1]
  %v618 = vlaneseq
  %v619 = vshrl.u32 %v618, 7
  %v620 = vsub.s32 0, %v619
  %v621 = vrot.slane %v616, %v620
  %623 = vmatprep.subr.mxu0 0.0
  %624 = vmatpush1.msra.mxu0 %v615
  %625 = vmatprep.subr.mxu0 0.0
  %626 = vmatpush1.msra.mxu0 %v614
  %627 = vmatprep.subr.mxu0 0.0
  %628 = vmatpush1.msra.mxu0 %v613
  %629 = vmatprep.subr.mxu0 0.0
  %630 = vmatpush1.msra.mxu0 %v612
  %631 = vmatprep.subr.mxu0 0.0
  %632 = vmatpush1.msra.mxu0 %v611
  %633 = vmatprep.subr.mxu0 0.0
  %634 = vmatpush1.msra.mxu0 %v610
  %635 = vmatprep.subr.mxu0 0.0
  %636 = vmatpush1.msra.mxu0 %v609
  %637 = vmatprep.subr.mxu0 0.0
  %638 = vmatpush1.msra.mxu0 %v608
  %639 = vmatprep.subr.mxu0 0.0
  %640 = vmatpush1.msra.mxu0 %v607
  %641 = vmatprep.subr.mxu0 0.0
  %642 = vmatpush1.msra.mxu0 %v606
  %643 = vmatprep.subr.mxu0 0.0
  %644 = vmatpush1.msra.mxu0 %v605
  %645 = vmatprep.subr.mxu0 0.0
  %646 = vmatpush1.msra.mxu0 %v604
  %647 = vmatprep.subr.mxu0 0.0
  %648 = vmatpush1.msra.mxu0 %v603
  %649 = vmatprep.subr.mxu0 0.0
  %650 = vmatpush1.msra.mxu0 %v602
  %651 = vmatprep.subr.mxu0 0.0
  %652 = vmatpush1.msra.mxu0 %v601
  %653 = vmatprep.subr.mxu0 0.0
  %654 = vmatpush1.msra.mxu0 %v600
  %655 = vmatprep.subr.mxu0 0.0
  %656 = vmatpush2.msra.mxu0 0.0
  %657 = vmatprep.subr.mxu0 0.0
  %658 = vmatpush2.msra.mxu0 0.0
  %659 = vmatprep.subr.mxu0 0.0
  %660 = vmatpush2.msra.mxu0 0.0
  %661 = vmatprep.subr.mxu0 0.0
  %662 = vmatpush2.msra.mxu0 0.0
  %663 = vmatprep.subr.mxu0 0.0
  %664 = vmatpush2.msra.mxu0 0.0
  %665 = vmatprep.subr.mxu0 0.0
  %666 = vmatpush2.msra.mxu0 0.0
  %667 = vmatprep.subr.mxu0 0.0
  %668 = vmatpush2.msra.mxu0 0.0
  %669 = vmatprep.subr.mxu0 0.0
  %670 = vmatpush2.msra.mxu0 0.0
  %671 = vmatprep.subr.mxu0 0.0
  %672 = vmatpush2.msra.mxu0 0.0
  %673 = vmatprep.subr.mxu0 0.0
  %674 = vmatpush2.msra.mxu0 0.0
  %675 = vmatprep.subr.mxu0 0.0
  %676 = vmatpush2.msra.mxu0 0.0
  %677 = vmatprep.subr.mxu0 0.0
  %678 = vmatpush2.msra.mxu0 0.0
  %679 = vmatprep.subr.mxu0 0.0
  %680 = vmatpush2.msra.mxu0 0.0
  %681 = vmatprep.subr.mxu0 0.0
  %682 = vmatpush2.msra.mxu0 0.0
  %683 = vmatprep.subr.mxu0 0.0
  %684 = vmatpush2.msra.mxu0 0.0
  %685 = vmatprep.subr.mxu0 0.0
  %686 = vmatpush2.msra.mxu0 0.0
  %687 = vmatprep.mubr.f32.mxu0 0.0
  %688 = vmatmul.mubr.f32.gmra.mxu0 %v599
  %v689 = vpop.f32.mrf.mxu0
  %v690 = vadd.f32 %v621, %v689
  %v691 = vpop.f32.mrf.mxu0
  %692 = vdwg.mxu0
  %v693 = vmul.f32 %v690, %v690
  %vm694 = vcmask 130048
  %v695 = vsel %vm694, %v693, 0.0
  %696 = vadd.xlane.f32.xlu0 %v695
  %v697 = vpop.xlane.xlu0 %696
  %v698 = vrsqrt.pop %v697
  %v699 = vmul.f32 %v697, %v698
  %vm700 = vcmp.eq.f32.partialorder %v697, inf
  %v701 = vsel %vm700, %v697, %v699
  %vm702 = vcmp.eq.f32.partialorder %v697, 0.0
  %v703 = vand.u32 %v697, 2147483648
  %v704 = vsel %vm702, %v703, %v701
  %v705 = vmax.f32 %v704, 1e-08
  %v706 = vrcp.pop %v705
  %v707 = vmul.f32 %v690, %v706
  %v708 = vadd.f32 %v690, 1.0
  %710 = vrot.lane.b32.xlu0 %v693, 16
  %v711 = vpop.permute.xlu0 %710
  %v713 = vsub.f32 %v708, %v711
  %v714 = vmul.f32 %v690, 1.442695
  %v715 = vpow.pop %v714
  %v716 = vsub.f32 %v713, %v715
  %718 = vrot.lane.b32.xlu0 %v716, 80
  %v719 = vpop.permute.xlu0 %718
  %v721 = vsel %vm694, %v719, 0.0
  %722 = vadd.xlane.f32.xlu0 %v721
  %v723 = vpop.xlane.xlu0 %722
  %v724 = vmul.f32 %v723, -0.5
  %v725 = vrot.slane %v724, 4
  %v726 = vadd.f32 %v724, %v725
  %v727 = vrot.slane %v726, 2
  %v728 = vadd.f32 %v726, %v727
  %v729 = vrot.slane %v728, 1
  %v730 = vadd.f32 %v728, %v729
  %v731 = vrcp.pop 4.0
  %v732 = vmul.f32 %v730, %v731
  %v733 = vmul.f32 %v690, 0.5
  %v734 = vmul.f32 %v733, 1.442695
  %v735 = vpow.pop %v734
  %v736 = vld [vmem:[%s15] sm:$0xff]
  %738 = vrot.lane.b32.xlu0 %v736, 48
  %v739 = vpop.permute.xlu0 %738
  %v741 = vmul.f32 %v735, %v739
  %743 = vrot.lane.b32.xlu0 %v741, 112
  %v744 = vpop.permute.xlu0 %743
  %v746 = vadd.f32 %v690, %v744
  %v747 = vld [vmem:[%s10] sm:$0xff]
  %v748 = vld [vmem:[%s10 + $0x8] sm:$0xff]
  %v750 = vsel %vm694, %v707, 0
  %752 = vmatprep.subr.mxu0 0.0
  %753 = vmatpush1.msra.mxu0 0.0
  %754 = vmatprep.subr.mxu0 0.0
  %755 = vmatpush1.msra.mxu0 0.0
  %756 = vmatprep.subr.mxu0 0.0
  %757 = vmatpush1.msra.mxu0 0.0
  %758 = vmatprep.subr.mxu0 0.0
  %759 = vmatpush1.msra.mxu0 0.0
  %760 = vmatprep.subr.mxu0 0.0
  %761 = vmatpush1.msra.mxu0 0.0
  %762 = vmatprep.subr.mxu0 0.0
  %763 = vmatpush1.msra.mxu0 0.0
  %764 = vmatprep.subr.mxu0 0.0
  %765 = vmatpush1.msra.mxu0 0.0
  %766 = vmatprep.subr.mxu0 0.0
  %767 = vmatpush1.msra.mxu0 0.0
  %768 = vmatprep.subr.mxu0 0.0
  %769 = vmatpush1.msra.mxu0 0.0
  %770 = vmatprep.subr.mxu0 0.0
  %771 = vmatpush1.msra.mxu0 0.0
  %772 = vmatprep.subr.mxu0 0.0
  %773 = vmatpush1.msra.mxu0 0.0
  %774 = vmatprep.subr.mxu0 0.0
  %775 = vmatpush1.msra.mxu0 0.0
  %776 = vmatprep.subr.mxu0 0.0
  %777 = vmatpush1.msra.mxu0 0.0
  %778 = vmatprep.subr.mxu0 0.0
  %779 = vmatpush1.msra.mxu0 0.0
  %780 = vmatprep.subr.mxu0 0.0
  %781 = vmatpush1.msra.mxu0 %v748
  %782 = vmatprep.subr.mxu0 0.0
  %783 = vmatpush1.msra.mxu0 %v747
  %784 = vmatprep.subr.mxu0 0.0
  %785 = vmatpush2.msra.mxu0 0.0
  %786 = vmatprep.subr.mxu0 0.0
  %787 = vmatpush2.msra.mxu0 0.0
  %788 = vmatprep.subr.mxu0 0.0
  %789 = vmatpush2.msra.mxu0 0.0
  %790 = vmatprep.subr.mxu0 0.0
  %791 = vmatpush2.msra.mxu0 0.0
  %792 = vmatprep.subr.mxu0 0.0
  %793 = vmatpush2.msra.mxu0 0.0
  %794 = vmatprep.subr.mxu0 0.0
  %795 = vmatpush2.msra.mxu0 0.0
  %796 = vmatprep.subr.mxu0 0.0
  %797 = vmatpush2.msra.mxu0 0.0
  %798 = vmatprep.subr.mxu0 0.0
  %799 = vmatpush2.msra.mxu0 0.0
  %800 = vmatprep.subr.mxu0 0.0
  %801 = vmatpush2.msra.mxu0 0.0
  %802 = vmatprep.subr.mxu0 0.0
  %803 = vmatpush2.msra.mxu0 0.0
  %804 = vmatprep.subr.mxu0 0.0
  %805 = vmatpush2.msra.mxu0 0.0
  %806 = vmatprep.subr.mxu0 0.0
  %807 = vmatpush2.msra.mxu0 0.0
  %808 = vmatprep.subr.mxu0 0.0
  %809 = vmatpush2.msra.mxu0 0.0
  %810 = vmatprep.subr.mxu0 0.0
  %811 = vmatpush2.msra.mxu0 0.0
  %812 = vmatprep.subr.mxu0 0.0
  %813 = vmatpush2.msra.mxu0 0.0
  %814 = vmatprep.subr.mxu0 0.0
  %815 = vmatpush2.msra.mxu0 0.0
  %816 = vmatprep.mubr.f32.mxu0 0.0
  %817 = vmatmul.mubr.f32.gmra.mxu0 %v750
  %v818 = vpop.f32.mrf.mxu0
  %v819 = vadd.f32 0.0, %v818
  %v820 = vpop.f32.mrf.mxu0
  %821 = vdwg.mxu0
  %v822 = vld [vmem:[%s11] sm:$0xff]
  %v823 = vld [vmem:[%s11 + $0x8] sm:$0xff]
  %825 = vrot.lane.b32.xlu0 %v746, 96
  %v826 = vpop.permute.xlu0 %825
  %v827 = vsel %vm694, %v826, 0
  %829 = vmatprep.subr.mxu0 0.0
  %830 = vmatpush1.msra.mxu0 0.0
  %831 = vmatprep.subr.mxu0 0.0
  %832 = vmatpush1.msra.mxu0 0.0
  %833 = vmatprep.subr.mxu0 0.0
  %834 = vmatpush1.msra.mxu0 0.0
  %835 = vmatprep.subr.mxu0 0.0
  %836 = vmatpush1.msra.mxu0 0.0
  %837 = vmatprep.subr.mxu0 0.0
  %838 = vmatpush1.msra.mxu0 0.0
  %839 = vmatprep.subr.mxu0 0.0
  %840 = vmatpush1.msra.mxu0 0.0
  %841 = vmatprep.subr.mxu0 0.0
  %842 = vmatpush1.msra.mxu0 0.0
  %843 = vmatprep.subr.mxu0 0.0
  %844 = vmatpush1.msra.mxu0 0.0
  %845 = vmatprep.subr.mxu0 0.0
  %846 = vmatpush1.msra.mxu0 0.0
  %847 = vmatprep.subr.mxu0 0.0
  %848 = vmatpush1.msra.mxu0 0.0
  %849 = vmatprep.subr.mxu0 0.0
  %850 = vmatpush1.msra.mxu0 0.0
  %851 = vmatprep.subr.mxu0 0.0
  %852 = vmatpush1.msra.mxu0 0.0
  %853 = vmatprep.subr.mxu0 0.0
  %854 = vmatpush1.msra.mxu0 0.0
  %855 = vmatprep.subr.mxu0 0.0
  %856 = vmatpush1.msra.mxu0 0.0
  %857 = vmatprep.subr.mxu0 0.0
  %858 = vmatpush1.msra.mxu0 %v823
  %859 = vmatprep.subr.mxu0 0.0
  %860 = vmatpush1.msra.mxu0 %v822
  %861 = vmatprep.subr.mxu0 0.0
  %862 = vmatpush2.msra.mxu0 0.0
  %863 = vmatprep.subr.mxu0 0.0
  %864 = vmatpush2.msra.mxu0 0.0
  %865 = vmatprep.subr.mxu0 0.0
  %866 = vmatpush2.msra.mxu0 0.0
  %867 = vmatprep.subr.mxu0 0.0
  %868 = vmatpush2.msra.mxu0 0.0
  %869 = vmatprep.subr.mxu0 0.0
  %870 = vmatpush2.msra.mxu0 0.0
  %871 = vmatprep.subr.mxu0 0.0
  %872 = vmatpush2.msra.mxu0 0.0
  %873 = vmatprep.subr.mxu0 0.0
  %874 = vmatpush2.msra.mxu0 0.0
  %875 = vmatprep.subr.mxu0 0.0
  %876 = vmatpush2.msra.mxu0 0.0
  %877 = vmatprep.subr.mxu0 0.0
  %878 = vmatpush2.msra.mxu0 0.0
  %879 = vmatprep.subr.mxu0 0.0
  %880 = vmatpush2.msra.mxu0 0.0
  %881 = vmatprep.subr.mxu0 0.0
  %882 = vmatpush2.msra.mxu0 0.0
  %883 = vmatprep.subr.mxu0 0.0
  %884 = vmatpush2.msra.mxu0 0.0
  %885 = vmatprep.subr.mxu0 0.0
  %886 = vmatpush2.msra.mxu0 0.0
  %887 = vmatprep.subr.mxu0 0.0
  %888 = vmatpush2.msra.mxu0 0.0
  %889 = vmatprep.subr.mxu0 0.0
  %890 = vmatpush2.msra.mxu0 0.0
  %891 = vmatprep.subr.mxu0 0.0
  %892 = vmatpush2.msra.mxu0 0.0
  %893 = vmatprep.mubr.f32.mxu0 0.0
  %894 = vmatmul.mubr.f32.gmra.mxu0 %v827
  %v895 = vpop.f32.mrf.mxu0
  %v896 = vadd.f32 0.0, %v895
  %v897 = vpop.f32.mrf.mxu0
  %898 = vdwg.mxu0
  %v899 = vld [vmem:[%s12] sm:$0x1]
  %v900 = vld [vmem:[%s13] sm:$0xff]
  %v901 = vld [vmem:[%s13 + $0x8] sm:$0xff]
  %v902 = vld [vmem:[%s13 + $0x10] sm:$0xff]
  %v903 = vld [vmem:[%s13 + $0x18] sm:$0xff]
  %v904 = vld [vmem:[%s14] sm:$0x1]
  %v905 = vmax.f32 %v259, 1e-08
  %v906 = vadd.f32 %v819, %v896
  %v908 = vlaneseq
  %v909 = vshrl.u32 %v908, 7
  %v910 = vsub.s32 0, %v909
  %v911 = vrot.slane %v899, %v910
  %v913 = vadd.f32 %v906, %v911
  %v914 = vmax.f32 %v913, 0.0
  %v916 = vlaneseq
  %v917 = vshrl.u32 %v916, 7
  %v918 = vsub.s32 0, %v917
  %v919 = vrot.slane %v904, %v918
  %v922 = vsel %vm444, %v914, 0
  %924 = vmatprep.subr.mxu0 0.0
  %925 = vmatpush1.msra.mxu0 0.0
  %926 = vmatprep.subr.mxu0 0.0
  %927 = vmatpush1.msra.mxu0 0.0
  %928 = vmatprep.subr.mxu0 0.0
  %929 = vmatpush1.msra.mxu0 0.0
  %930 = vmatprep.subr.mxu0 0.0
  %931 = vmatpush1.msra.mxu0 0.0
  %932 = vmatprep.subr.mxu0 0.0
  %933 = vmatpush1.msra.mxu0 0.0
  %934 = vmatprep.subr.mxu0 0.0
  %935 = vmatpush1.msra.mxu0 0.0
  %936 = vmatprep.subr.mxu0 0.0
  %937 = vmatpush1.msra.mxu0 0.0
  %938 = vmatprep.subr.mxu0 0.0
  %939 = vmatpush1.msra.mxu0 0.0
  %940 = vmatprep.subr.mxu0 0.0
  %941 = vmatpush1.msra.mxu0 0.0
  %942 = vmatprep.subr.mxu0 0.0
  %943 = vmatpush1.msra.mxu0 0.0
  %944 = vmatprep.subr.mxu0 0.0
  %945 = vmatpush1.msra.mxu0 0.0
  %946 = vmatprep.subr.mxu0 0.0
  %947 = vmatpush1.msra.mxu0 0.0
  %948 = vmatprep.subr.mxu0 0.0
  %949 = vmatpush1.msra.mxu0 %v903
  %950 = vmatprep.subr.mxu0 0.0
  %951 = vmatpush1.msra.mxu0 %v902
  %952 = vmatprep.subr.mxu0 0.0
  %953 = vmatpush1.msra.mxu0 %v901
  %954 = vmatprep.subr.mxu0 0.0
  %955 = vmatpush1.msra.mxu0 %v900
  %956 = vmatprep.subr.mxu0 0.0
  %957 = vmatpush2.msra.mxu0 0.0
  %958 = vmatprep.subr.mxu0 0.0
  %959 = vmatpush2.msra.mxu0 0.0
  %960 = vmatprep.subr.mxu0 0.0
  %961 = vmatpush2.msra.mxu0 0.0
  %962 = vmatprep.subr.mxu0 0.0
  %963 = vmatpush2.msra.mxu0 0.0
  %964 = vmatprep.subr.mxu0 0.0
  %965 = vmatpush2.msra.mxu0 0.0
  %966 = vmatprep.subr.mxu0 0.0
  %967 = vmatpush2.msra.mxu0 0.0
  %968 = vmatprep.subr.mxu0 0.0
  %969 = vmatpush2.msra.mxu0 0.0
  %970 = vmatprep.subr.mxu0 0.0
  %971 = vmatpush2.msra.mxu0 0.0
  %972 = vmatprep.subr.mxu0 0.0
  %973 = vmatpush2.msra.mxu0 0.0
  %974 = vmatprep.subr.mxu0 0.0
  %975 = vmatpush2.msra.mxu0 0.0
  %976 = vmatprep.subr.mxu0 0.0
  %977 = vmatpush2.msra.mxu0 0.0
  %978 = vmatprep.subr.mxu0 0.0
  %979 = vmatpush2.msra.mxu0 0.0
  %980 = vmatprep.subr.mxu0 0.0
  %981 = vmatpush2.msra.mxu0 0.0
  %982 = vmatprep.subr.mxu0 0.0
  %983 = vmatpush2.msra.mxu0 0.0
  %984 = vmatprep.subr.mxu0 0.0
  %985 = vmatpush2.msra.mxu0 0.0
  %986 = vmatprep.subr.mxu0 0.0
  %987 = vmatpush2.msra.mxu0 0.0
  %988 = vmatprep.mubr.f32.mxu0 0.0
  %989 = vmatmul.mubr.f32.gmra.mxu0 %v922
  %v990 = vpop.f32.mrf.mxu0
  %v991 = vadd.f32 %v919, %v990
  %v992 = vpop.f32.mrf.mxu0
  %993 = vdwg.mxu0
  %vm994 = vcmask 1043456
  %v995 = vsel %vm994, %v991, -inf
  %996 = vmax.xlane.f32.xlu0 %v995
  %v997 = vpop.xlane.xlu0 %996
  %v998 = vsub.f32 %v991, %v997
  %v999 = vmul.f32 %v998, 1.442695
  %v1000 = vpow.pop %v999
  %v1001 = vsel %vm994, %v1000, 0.0
  %1002 = vadd.xlane.f32.xlu0 %v1001
  %v1003 = vpop.xlane.xlu0 %1002
  %v1004 = vlog2.pop %v1003
  %v1005 = vmul.f32 %v1004, 0.6931472
  %v1006 = vadd.f32 %v997, %v1005
  %v1007 = vmul.f32 %v252, %v991
  %v1008 = vsel %vm994, %v1007, 0.0
  %1009 = vadd.xlane.f32.xlu0 %v1008
  %v1010 = vpop.xlane.xlu0 %1009
  %v1011 = vrcp.pop %v905
  %v1012 = vmul.f32 %v1010, %v1011
  %v1013 = vsub.f32 %v1006, %v1012
  %v1014 = vsel %vm994, %v1013, 0.0
  %v1015 = vrot.slane %v1014, 4
  %v1016 = vadd.f32 %v1014, %v1015
  %v1017 = vrot.slane %v1016, 2
  %v1018 = vadd.f32 %v1016, %v1017
  %v1019 = vrot.slane %v1018, 1
  %v1020 = vadd.f32 %v1018, %v1019
  %v1021 = vmul.f32 %v1020, %v731
  %v1022 = vrot.slane %v914, 4
  %v1023 = vsel %vm444, %v1022, 0
  %1025 = vmatprep.subr.mxu0 0.0
  %1026 = vmatpush1.msra.mxu0 0.0
  %1027 = vmatprep.subr.mxu0 0.0
  %1028 = vmatpush1.msra.mxu0 0.0
  %1029 = vmatprep.subr.mxu0 0.0
  %1030 = vmatpush1.msra.mxu0 0.0
  %1031 = vmatprep.subr.mxu0 0.0
  %1032 = vmatpush1.msra.mxu0 0.0
  %1033 = vmatprep.subr.mxu0 0.0
  %1034 = vmatpush1.msra.mxu0 0.0
  %1035 = vmatprep.subr.mxu0 0.0
  %1036 = vmatpush1.msra.mxu0 0.0
  %1037 = vmatprep.subr.mxu0 0.0
  %1038 = vmatpush1.msra.mxu0 0.0
  %1039 = vmatprep.subr.mxu0 0.0
  %1040 = vmatpush1.msra.mxu0 0.0
  %1041 = vmatprep.subr.mxu0 0.0
  %1042 = vmatpush1.msra.mxu0 0.0
  %1043 = vmatprep.subr.mxu0 0.0
  %1044 = vmatpush1.msra.mxu0 0.0
  %1045 = vmatprep.subr.mxu0 0.0
  %1046 = vmatpush1.msra.mxu0 0.0
  %1047 = vmatprep.subr.mxu0 0.0
  %1048 = vmatpush1.msra.mxu0 0.0
  %1049 = vmatprep.subr.mxu0 0.0
  %1050 = vmatpush1.msra.mxu0 %v903
  %1051 = vmatprep.subr.mxu0 0.0
  %1052 = vmatpush1.msra.mxu0 %v902
  %1053 = vmatprep.subr.mxu0 0.0
  %1054 = vmatpush1.msra.mxu0 %v901
  %1055 = vmatprep.subr.mxu0 0.0
  %1056 = vmatpush1.msra.mxu0 %v900
  %1057 = vmatprep.subr.mxu0 0.0
  %1058 = vmatpush2.msra.mxu0 0.0
  %1059 = vmatprep.subr.mxu0 0.0
  %1060 = vmatpush2.msra.mxu0 0.0
  %1061 = vmatprep.subr.mxu0 0.0
  %1062 = vmatpush2.msra.mxu0 0.0
  %1063 = vmatprep.subr.mxu0 0.0
  %1064 = vmatpush2.msra.mxu0 0.0
  %1065 = vmatprep.subr.mxu0 0.0
  %1066 = vmatpush2.msra.mxu0 0.0
  %1067 = vmatprep.subr.mxu0 0.0
  %1068 = vmatpush2.msra.mxu0 0.0
  %1069 = vmatprep.subr.mxu0 0.0
  %1070 = vmatpush2.msra.mxu0 0.0
  %1071 = vmatprep.subr.mxu0 0.0
  %1072 = vmatpush2.msra.mxu0 0.0
  %1073 = vmatprep.subr.mxu0 0.0
  %1074 = vmatpush2.msra.mxu0 0.0
  %1075 = vmatprep.subr.mxu0 0.0
  %1076 = vmatpush2.msra.mxu0 0.0
  %1077 = vmatprep.subr.mxu0 0.0
  %1078 = vmatpush2.msra.mxu0 0.0
  %1079 = vmatprep.subr.mxu0 0.0
  %1080 = vmatpush2.msra.mxu0 0.0
  %1081 = vmatprep.subr.mxu0 0.0
  %1082 = vmatpush2.msra.mxu0 0.0
  %1083 = vmatprep.subr.mxu0 0.0
  %1084 = vmatpush2.msra.mxu0 0.0
  %1085 = vmatprep.subr.mxu0 0.0
  %1086 = vmatpush2.msra.mxu0 0.0
  %1087 = vmatprep.subr.mxu0 0.0
  %1088 = vmatpush2.msra.mxu0 0.0
  %1089 = vmatprep.mubr.f32.mxu0 0.0
  %1090 = vmatmul.mubr.f32.gmra.mxu0 %v1023
  %v1091 = vpop.f32.mrf.mxu0
  %v1092 = vadd.f32 %v919, %v1091
  %v1093 = vpop.f32.mrf.mxu0
  %1094 = vdwg.mxu0
  %v1095 = vsel %vm994, %v1092, -inf
  %1096 = vmax.xlane.f32.xlu0 %v1095
  %v1097 = vpop.xlane.xlu0 %1096
  %v1098 = vsub.f32 %v1092, %v1097
  %v1099 = vmul.f32 %v1098, 1.442695
  %v1100 = vpow.pop %v1099
  %v1101 = vsel %vm994, %v1100, 0.0
  %1102 = vadd.xlane.f32.xlu0 %v1101
  %v1103 = vpop.xlane.xlu0 %1102
  %v1104 = vlog2.pop %v1103
  %v1105 = vmul.f32 %v1104, 0.6931472
  %v1106 = vadd.f32 %v1097, %v1105
  %v1108 = vrot.slane %v1092, 4
  %v1110 = vmul.f32 %v252, %v1108
  %vm1111 = vcmask 1047556
  %v1112 = vsel %vm1111, %v1110, 0.0
  %1113 = vadd.xlane.f32.xlu0 %v1112
  %v1114 = vpop.xlane.xlu0 %1113
  %v1115 = vmul.f32 %v1114, %v1011
  %v1117 = vrot.slane %v1115, 4
  %v1119 = vsub.f32 %v1106, %v1117
  %vm1120 = vcmask 3072
  %v1121 = vsel %vm1120, %v1119, 0.0
  %v1122 = vrot.slane %v1121, 4
  %v1123 = vadd.f32 %v1121, %v1122
  %v1124 = vrot.slane %v1123, 2
  %v1125 = vadd.f32 %v1123, %v1124
  %v1126 = vrot.slane %v1125, 1
  %v1127 = vadd.f32 %v1125, %v1126
  %v1128 = vmul.f32 %v1127, %v731
  %v1130 = vrot.slane %v896, 4
  %v1132 = vadd.f32 %v819, %v1130
  %v1133 = vadd.f32 %v1132, %v911
  %v1134 = vmax.f32 %v1133, 0.0
  %v1136 = vrot.slane %v1134, 4
  %v1137 = vsel %vm444, %v1136, 0
  %1139 = vmatprep.subr.mxu0 0.0
  %1140 = vmatpush1.msra.mxu0 0.0
  %1141 = vmatprep.subr.mxu0 0.0
  %1142 = vmatpush1.msra.mxu0 0.0
  %1143 = vmatprep.subr.mxu0 0.0
  %1144 = vmatpush1.msra.mxu0 0.0
  %1145 = vmatprep.subr.mxu0 0.0
  %1146 = vmatpush1.msra.mxu0 0.0
  %1147 = vmatprep.subr.mxu0 0.0
  %1148 = vmatpush1.msra.mxu0 0.0
  %1149 = vmatprep.subr.mxu0 0.0
  %1150 = vmatpush1.msra.mxu0 0.0
  %1151 = vmatprep.subr.mxu0 0.0
  %1152 = vmatpush1.msra.mxu0 0.0
  %1153 = vmatprep.subr.mxu0 0.0
  %1154 = vmatpush1.msra.mxu0 0.0
  %1155 = vmatprep.subr.mxu0 0.0
  %1156 = vmatpush1.msra.mxu0 0.0
  %1157 = vmatprep.subr.mxu0 0.0
  %1158 = vmatpush1.msra.mxu0 0.0
  %1159 = vmatprep.subr.mxu0 0.0
  %1160 = vmatpush1.msra.mxu0 0.0
  %1161 = vmatprep.subr.mxu0 0.0
  %1162 = vmatpush1.msra.mxu0 0.0
  %1163 = vmatprep.subr.mxu0 0.0
  %1164 = vmatpush1.msra.mxu0 %v903
  %1165 = vmatprep.subr.mxu0 0.0
  %1166 = vmatpush1.msra.mxu0 %v902
  %1167 = vmatprep.subr.mxu0 0.0
  %1168 = vmatpush1.msra.mxu0 %v901
  %1169 = vmatprep.subr.mxu0 0.0
  %1170 = vmatpush1.msra.mxu0 %v900
  %1171 = vmatprep.subr.mxu0 0.0
  %1172 = vmatpush2.msra.mxu0 0.0
  %1173 = vmatprep.subr.mxu0 0.0
  %1174 = vmatpush2.msra.mxu0 0.0
  %1175 = vmatprep.subr.mxu0 0.0
  %1176 = vmatpush2.msra.mxu0 0.0
  %1177 = vmatprep.subr.mxu0 0.0
  %1178 = vmatpush2.msra.mxu0 0.0
  %1179 = vmatprep.subr.mxu0 0.0
  %1180 = vmatpush2.msra.mxu0 0.0
  %1181 = vmatprep.subr.mxu0 0.0
  %1182 = vmatpush2.msra.mxu0 0.0
  %1183 = vmatprep.subr.mxu0 0.0
  %1184 = vmatpush2.msra.mxu0 0.0
  %1185 = vmatprep.subr.mxu0 0.0
  %1186 = vmatpush2.msra.mxu0 0.0
  %1187 = vmatprep.subr.mxu0 0.0
  %1188 = vmatpush2.msra.mxu0 0.0
  %1189 = vmatprep.subr.mxu0 0.0
  %1190 = vmatpush2.msra.mxu0 0.0
  %1191 = vmatprep.subr.mxu0 0.0
  %1192 = vmatpush2.msra.mxu0 0.0
  %1193 = vmatprep.subr.mxu0 0.0
  %1194 = vmatpush2.msra.mxu0 0.0
  %1195 = vmatprep.subr.mxu0 0.0
  %1196 = vmatpush2.msra.mxu0 0.0
  %1197 = vmatprep.subr.mxu0 0.0
  %1198 = vmatpush2.msra.mxu0 0.0
  %1199 = vmatprep.subr.mxu0 0.0
  %1200 = vmatpush2.msra.mxu0 0.0
  %1201 = vmatprep.subr.mxu0 0.0
  %1202 = vmatpush2.msra.mxu0 0.0
  %1203 = vmatprep.mubr.f32.mxu0 0.0
  %1204 = vmatmul.mubr.f32.gmra.mxu0 %v1137
  %v1205 = vpop.f32.mrf.mxu0
  %v1206 = vadd.f32 %v919, %v1205
  %v1207 = vpop.f32.mrf.mxu0
  %1208 = vdwg.mxu0
  %v1209 = vsel %vm994, %v1206, -inf
  %1210 = vmax.xlane.f32.xlu0 %v1209
  %v1211 = vpop.xlane.xlu0 %1210
  %v1212 = vsub.f32 %v1206, %v1211
  %v1213 = vmul.f32 %v1212, 1.442695
  %v1214 = vpow.pop %v1213
  %v1215 = vsel %vm994, %v1214, 0.0
  %1216 = vadd.xlane.f32.xlu0 %v1215
  %v1217 = vpop.xlane.xlu0 %1216
  %v1218 = vlog2.pop %v1217
  %v1219 = vmul.f32 %v1218, 0.6931472
  %v1220 = vadd.f32 %v1211, %v1219
  %v1221 = vmul.f32 %v252, %v1206
  %v1222 = vsel %vm994, %v1221, 0.0
  %1223 = vadd.xlane.f32.xlu0 %v1222
  %v1224 = vpop.xlane.xlu0 %1223
  %v1225 = vmul.f32 %v1224, %v1011
  %v1226 = vsub.f32 %v1220, %v1225
  %v1227 = vsel %vm994, %v1226, 0.0
  %v1228 = vrot.slane %v1227, 4
  %v1229 = vadd.f32 %v1227, %v1228
  %v1230 = vrot.slane %v1229, 2
  %v1231 = vadd.f32 %v1229, %v1230
  %v1232 = vrot.slane %v1231, 1
  %v1233 = vadd.f32 %v1231, %v1232
  %v1234 = vmul.f32 %v1233, %v731
  %v1235 = vsel %vm444, %v1134, 0
  %1237 = vmatprep.subr.mxu0 0.0
  %1238 = vmatpush1.msra.mxu0 0.0
  %1239 = vmatprep.subr.mxu0 0.0
  %1240 = vmatpush1.msra.mxu0 0.0
  %1241 = vmatprep.subr.mxu0 0.0
  %1242 = vmatpush1.msra.mxu0 0.0
  %1243 = vmatprep.subr.mxu0 0.0
  %1244 = vmatpush1.msra.mxu0 0.0
  %1245 = vmatprep.subr.mxu0 0.0
  %1246 = vmatpush1.msra.mxu0 0.0
  %1247 = vmatprep.subr.mxu0 0.0
  %1248 = vmatpush1.msra.mxu0 0.0
  %1249 = vmatprep.subr.mxu0 0.0
  %1250 = vmatpush1.msra.mxu0 0.0
  %1251 = vmatprep.subr.mxu0 0.0
  %1252 = vmatpush1.msra.mxu0 0.0
  %1253 = vmatprep.subr.mxu0 0.0
  %1254 = vmatpush1.msra.mxu0 0.0
  %1255 = vmatprep.subr.mxu0 0.0
  %1256 = vmatpush1.msra.mxu0 0.0
  %1257 = vmatprep.subr.mxu0 0.0
  %1258 = vmatpush1.msra.mxu0 0.0
  %1259 = vmatprep.subr.mxu0 0.0
  %1260 = vmatpush1.msra.mxu0 0.0
  %1261 = vmatprep.subr.mxu0 0.0
  %1262 = vmatpush1.msra.mxu0 %v903
  %1263 = vmatprep.subr.mxu0 0.0
  %1264 = vmatpush1.msra.mxu0 %v902
  %1265 = vmatprep.subr.mxu0 0.0
  %1266 = vmatpush1.msra.mxu0 %v901
  %1267 = vmatprep.subr.mxu0 0.0
  %1268 = vmatpush1.msra.mxu0 %v900
  %1269 = vmatprep.subr.mxu0 0.0
  %1270 = vmatpush2.msra.mxu0 0.0
  %1271 = vmatprep.subr.mxu0 0.0
  %1272 = vmatpush2.msra.mxu0 0.0
  %1273 = vmatprep.subr.mxu0 0.0
  %1274 = vmatpush2.msra.mxu0 0.0
  %1275 = vmatprep.subr.mxu0 0.0
  %1276 = vmatpush2.msra.mxu0 0.0
  %1277 = vmatprep.subr.mxu0 0.0
  %1278 = vmatpush2.msra.mxu0 0.0
  %1279 = vmatprep.subr.mxu0 0.0
  %1280 = vmatpush2.msra.mxu0 0.0
  %1281 = vmatprep.subr.mxu0 0.0
  %1282 = vmatpush2.msra.mxu0 0.0
  %1283 = vmatprep.subr.mxu0 0.0
  %1284 = vmatpush2.msra.mxu0 0.0
  %1285 = vmatprep.subr.mxu0 0.0
  %1286 = vmatpush2.msra.mxu0 0.0
  %1287 = vmatprep.subr.mxu0 0.0
  %1288 = vmatpush2.msra.mxu0 0.0
  %1289 = vmatprep.subr.mxu0 0.0
  %1290 = vmatpush2.msra.mxu0 0.0
  %1291 = vmatprep.subr.mxu0 0.0
  %1292 = vmatpush2.msra.mxu0 0.0
  %1293 = vmatprep.subr.mxu0 0.0
  %1294 = vmatpush2.msra.mxu0 0.0
  %1295 = vmatprep.subr.mxu0 0.0
  %1296 = vmatpush2.msra.mxu0 0.0
  %1297 = vmatprep.subr.mxu0 0.0
  %1298 = vmatpush2.msra.mxu0 0.0
  %1299 = vmatprep.subr.mxu0 0.0
  %1300 = vmatpush2.msra.mxu0 0.0
  %1301 = vmatprep.mubr.f32.mxu0 0.0
  %1302 = vmatmul.mubr.f32.gmra.mxu0 %v1235
  %v1303 = vpop.f32.mrf.mxu0
  %v1304 = vadd.f32 %v919, %v1303
  %v1305 = vpop.f32.mrf.mxu0
  %1306 = vdwg.mxu0
  %v1307 = vsel %vm994, %v1304, -inf
  %1308 = vmax.xlane.f32.xlu0 %v1307
  %v1309 = vpop.xlane.xlu0 %1308
  %v1310 = vsub.f32 %v1304, %v1309
  %v1311 = vmul.f32 %v1310, 1.442695
  %v1312 = vpow.pop %v1311
  %v1313 = vsel %vm994, %v1312, 0.0
  %1314 = vadd.xlane.f32.xlu0 %v1313
  %v1315 = vpop.xlane.xlu0 %1314
  %v1316 = vlog2.pop %v1315
  %v1317 = vmul.f32 %v1316, 0.6931472
  %v1318 = vadd.f32 %v1309, %v1317
  %v1320 = vrot.slane %v1304, 4
  %v1322 = vmul.f32 %v252, %v1320
  %v1323 = vsel %vm1111, %v1322, 0.0
  %1324 = vadd.xlane.f32.xlu0 %v1323
  %v1325 = vpop.xlane.xlu0 %1324
  %v1326 = vmul.f32 %v1325, %v1011
  %v1328 = vrot.slane %v1326, 4
  %v1330 = vsub.f32 %v1318, %v1328
  %v1331 = vsel %vm1120, %v1330, 0.0
  %v1332 = vrot.slane %v1331, 4
  %v1333 = vadd.f32 %v1331, %v1332
  %v1334 = vrot.slane %v1333, 2
  %v1335 = vadd.f32 %v1333, %v1334
  %v1336 = vrot.slane %v1335, 1
  %v1337 = vadd.f32 %v1335, %v1336
  %v1338 = vmul.f32 %v1337, %v731
  %v1339 = vadd.f32 %v1021, %v1128
  %v1340 = vadd.f32 %v1234, %v1338
  %v1341 = vld [vmem:[%s0] sm:$0x1]
  %v1342 = vadd.f32 %v1339, %v1340
  %v1343 = vmul.f32 %v1341, 0.0
  %v1344 = vadd.f32 %v1342, %v1343
  %v1345 = vmul.f32 %v1341, %v732
  %v1347 = vlaneseq
  %v1348 = vshrl.u32 %v1347, 7
  %v1349 = vsub.s32 0, %v1348
  %v1350 = vrot.slane %v1345, %v1349
  %1351 = vrot.lane.b32.xlu0 %v1350, 127
  %v1352 = vpop.permute.xlu0 %1351
  %v1354 = vadd.f32 %v1344, %v1352
  %vm1355 = vcmp.eq.s32.totalorder %v58, 0
  %1357 = vset.pattern.permute.xlu0 0
  %1358 = vperm.xlu0 %1357, %v1354
  %v1359 = vpop.permute.xlu0 %1358
  %v1361 = vsel %vm1355, %v1359, 0.0
  %vm1362 = vcmp.eq.s32.totalorder %v58, 1
  %v1363 = vsel %vm1362, 0.0, %v1361
  %vm1364 = vcmp.eq.s32.totalorder %v58, 2
  %v1365 = vsel %vm1364, %v732, %v1363
  %vm1366 = vcmp.eq.s32.totalorder %v58, 3
  %1368 = vset.pattern.permute.xlu0 0
  %1369 = vperm.xlu0 %1368, %v1339
  %v1370 = vpop.permute.xlu0 %1369
  %v1372 = vsel %vm1366, %v1370, %v1365
  %vm1373 = vcmp.eq.s32.totalorder %v58, 4
  %1375 = vset.pattern.permute.xlu0 0
  %1376 = vperm.xlu0 %1375, %v1340
  %v1377 = vpop.permute.xlu0 %1376
  %v1379 = vsel %vm1373, %v1377, %v1372
  %vm1380 = vcmp.eq.s32.totalorder %v58, 5
  %v1381 = vsel %vm1380, 0.0, %v1379
  %vm1382 = vcmp.eq.s32.totalorder %v58, 6
  %v1383 = vsel %vm1382, 0.0, %v1381
  %1384 = vst [vmem:[%s16] sm:$0x1] %v1383
  // Predicated region
  $region66: #{vgvae_forward.1} parent=0 // pred_check
    _
  $region67: #{vgvae_forward.1} parent=0 // pred_check_branch
    %1386 = sbr.rel (0) target = $region69
  $region68: #{vgvae_forward.1} parent=0 // pred_region
    _
  $region69: #{vgvae_forward.1} parent=0 // pred_fallthru
    _
  // Predicated region
  $region70: #{vgvae_forward.1} parent=0 // pred_check
    _
  $region71: #{vgvae_forward.1} parent=0 // pred_check_branch
    %1388 = sbr.rel (0) target = $region73
  $region72: #{vgvae_forward.1} parent=0 // pred_region
    _
  $region73: #{vgvae_forward.1} parent=0 // pred_fallthru
    _

</llo_original>
